<compile_context>
chip_gen: v5e
topology: v5e:2x2
jax: 0.10.0
libtpu: 0.0.40
codegen_flags: <defaults>
</compile_context>

<pallas_src>
import numpy as np
import jax
import jax.numpy as jnp
from jax.experimental import pallas as pl
from jax.experimental.pallas import tpu as pltpu


# ----------------------------- Pallas kernel ----------------------------- #
def actor_critic_kernel(x_ref, hid_ref,
                        wconv_ref, bconv_ref,
                        wfc1_ref, bfc1_ref,
                        wih_ref, whh_ref, blstm_ref,
                        whead_ref, bhead_ref,
                        head_ref, mem_ref,
                        state_ref):
    t = pl.program_id(0)

    # Load the initial recurrent state into the VMEM carry once.
    @pl.when(t == 0)
    def _():
        state_ref[...] = hid_ref[...]

    x = x_ref[...]                                     # (B, 256) bf16 (zero-padded 196->256)
    h_prev = state_ref[:, 0:256]                       # (B, 256) f32
    c_prev = state_ref[:, 256:512]                     # (B, 256) f32

    # conv1 as dense matmul (im2col-folded) + ReLU        -> (B, 384)  (cols 288.. are 0)
    conv = jnp.dot(x, wconv_ref[...], preferred_element_type=jnp.float32) + bconv_ref[...]
    conv = jnp.maximum(conv, 0.0).astype(jnp.bfloat16)

    # fc1 + ReLU                                          -> (B, 128)  (cols 64.. are 0)
    h1 = jnp.dot(conv, wfc1_ref[...], preferred_element_type=jnp.float32) + bfc1_ref[...]
    h1 = jnp.maximum(h1, 0.0).astype(jnp.bfloat16)

    # LSTMCell(64, 256); gate order i, f, g, o             -> (B, 1024)
    gates = (jnp.dot(h1, wih_ref[...], preferred_element_type=jnp.float32)
             + jnp.dot(h_prev.astype(jnp.bfloat16), whh_ref[...],
                       preferred_element_type=jnp.float32)
             + blstm_ref[...])
    i_g = jax.nn.sigmoid(gates[:, 0:256])
    f_g = jax.nn.sigmoid(gates[:, 256:512])
    g_g = jnp.tanh(gates[:, 512:768])
    o_g = jax.nn.sigmoid(gates[:, 768:1024])
    c_new = f_g * c_prev + i_g * g_g
    h_new = o_g * jnp.tanh(c_new)                      # embedding (B, 256) f32

    # Carry state + per-step memory output (two lane-aligned stores, no concat).
    state_ref[:, 0:256] = h_new
    state_ref[:, 256:512] = c_new
    mem_ref[:, 0:256] = h_new
    mem_ref[:, 256:512] = c_new

    # Fused policy/value heads: one lane-dense (B, 128) output.
    #   cols 0..3: softmax(fc_pi), col 4: fc_v, cols 5..127: zero padding.
    head = (jnp.dot(h_new.astype(jnp.bfloat16), whead_ref[...],
                    preferred_element_type=jnp.float32) + bhead_ref[...])
    lane = jax.lax.broadcasted_iota(jnp.int32, head.shape, 1)
    is_logit = lane < 4
    logits = jnp.where(is_logit, head, jnp.float32(-1e30))
    m = jnp.max(logits, axis=1, keepdims=True)
    e = jnp.where(is_logit, jnp.exp(logits - m), 0.0)
    inv = pl.reciprocal(jnp.sum(e, axis=1, keepdims=True), approx=True)
    prob = e * inv
    head_ref[...] = jnp.where(is_logit, prob, head)


# ------------------------------- Wrapper --------------------------------- #
def build_conv_as_matmul(conv_w, conv_b):
    """Fold Conv2d(4->8, k=2, s=1) on a 7x7 input into a dense matmul, padded to (256, 384).

    Input index:  ih*28 + iw*4 + cin   (NHWC flatten of (7,7,4)), rows 196..255 zero.
    Output index: cout*36 + oh*6 + ow  (PyTorch NCHW flatten of (8,6,6)), cols 288..383 zero.
    """
    conv_w = np.asarray(conv_w)                        # (8, 4, 2, 2) = (Cout, Cin, KH, KW)
    conv_b = np.asarray(conv_b)                        # (8,)
    W = np.zeros((196, 288), dtype=np.float32)
    for cout in range(8):
        for cin in range(4):
            for kh in range(2):
                for kw in range(2):
                    w = conv_w[cout, cin, kh, kw]
                    for oh in range(6):
                        for ow in range(6):
                            ih, iw = oh + kh, ow + kw
                            W[ih * 28 + iw * 4 + cin, cout * 36 + oh * 6 + ow] = w
    W = np.pad(W, ((0, 256 - 196), (0, 384 - 288)))
    b = np.zeros((1, 384), dtype=np.float32)
    b[0, :288] = np.repeat(conv_b, 36)
    return jnp.asarray(W), jnp.asarray(b)


def init_params(key):
    """Synthetic parameters in the torch layouts, folded/padded/cast for the kernel."""
    ks = jax.random.split(key, 12)

    def u(k, shape, fan_in):
        bound = 1.0 / np.sqrt(fan_in)
        return jax.random.uniform(k, shape, jnp.float32, -bound, bound)

    conv_w = u(ks[0], (8, 4, 2, 2), 4 * 2 * 2)         # torch Conv2d weight layout
    conv_b = u(ks[1], (8,), 4 * 2 * 2)
    w_conv, b_conv = build_conv_as_matmul(conv_w, conv_b)

    fc1_w = u(ks[2], (64, 288), 288)                   # torch Linear (out, in)
    fc1_b = u(ks[3], (64,), 288)
    w_ih = u(ks[4], (1024, 64), 256)                   # torch LSTMCell weight_ih
    w_hh = u(ks[5], (1024, 256), 256)                  # torch LSTMCell weight_hh
    b_ih = u(ks[6], (1024,), 256)
    b_hh = u(ks[7], (1024,), 256)
    pi_w = u(ks[8], (4, 256), 256)
    pi_b = u(ks[9], (4,), 256)
    v_w = u(ks[10], (1, 256), 256)
    v_b = u(ks[11], (1,), 256)

    # fc1: (288, 64) -> pad K 288->384, N 64->128
    w_fc1 = jnp.pad(fc1_w.T, ((0, 384 - 288), (0, 128 - 64)))
    b_fc1 = jnp.pad(fc1_b[None, :], ((0, 0), (0, 128 - 64)))
    # lstm input weight: (64, 1024) -> pad K 64->128
    w_ih_p = jnp.pad(w_ih.T, ((0, 128 - 64), (0, 0)))
    # fused heads: (256, 4+1) -> pad N to 128
    w_head = jnp.pad(jnp.concatenate([pi_w.T, v_w.T], axis=1), ((0, 0), (0, 128 - 5)))
    b_head = jnp.pad(jnp.concatenate([pi_b, v_b])[None, :], ((0, 0), (0, 128 - 5)))

    bf16 = jnp.bfloat16
    return {
        "w_conv": w_conv.astype(bf16), "b_conv": b_conv,
        "w_fc1": w_fc1.astype(bf16), "b_fc1": b_fc1,
        "w_ih": w_ih_p.astype(bf16), "w_hh": w_hh.T.astype(bf16),
        "b_lstm": (b_ih + b_hh)[None, :],
        "w_head": w_head.astype(bf16), "b_head": b_head,
    }


def actor_critic_rollout(xs, hidden, params):
    """xs: (T, B, 7, 7, 4) f32 NHWC observations; hidden: (B, 512) = concat(h, c).
    Returns (prob (T,B,4), memory (T,B,512), value (T,B,1)) for every timestep."""
    T, B = xs.shape[0], xs.shape[1]
    x_flat = xs.reshape(T, B, 196).astype(jnp.bfloat16)
    x_pad = jnp.pad(x_flat, ((0, 0), (0, 0), (0, 256 - 196)))        # (T, B, 256)

    const2 = lambda t: (0, 0)
    step3 = lambda t: (t, 0, 0)

    in_specs = [
        pl.BlockSpec((None, B, 256), step3),           # x (per-step block)
        pl.BlockSpec((B, 512), const2),                # initial hidden (read once)
        pl.BlockSpec((256, 384), const2),              # w_conv   (resident across grid)
        pl.BlockSpec((1, 384), const2),                # b_conv
        pl.BlockSpec((384, 128), const2),              # w_fc1
        pl.BlockSpec((1, 128), const2),                # b_fc1
        pl.BlockSpec((128, 1024), const2),             # w_ih
        pl.BlockSpec((256, 1024), const2),             # w_hh
        pl.BlockSpec((1, 1024), const2),               # b_lstm
        pl.BlockSpec((256, 128), const2),              # w_head (fused pi|v)
        pl.BlockSpec((1, 128), const2),                # b_head
    ]
    out_specs = (
        pl.BlockSpec((None, B, 128), step3),           # head: probs | value | pad
        pl.BlockSpec((None, B, 512), step3),           # memory = cat(h, c)
    )
    out_shape = (
        jax.ShapeDtypeStruct((T, B, 128), jnp.float32),
        jax.ShapeDtypeStruct((T, B, 512), jnp.float32),
    )

    head_out, mem_out = pl.pallas_call(
        actor_critic_kernel,
        grid=(T,),
        in_specs=in_specs,
        out_specs=out_specs,
        out_shape=out_shape,
        scratch_shapes=[pltpu.VMEM((B, 512), jnp.float32)],           # recurrent carry
        compiler_params=pltpu.CompilerParams(
            dimension_semantics=("arbitrary",),
            vmem_limit_bytes=64 * 1024 * 1024,
        ),
    )(x_pad, hidden,
      params["w_conv"], params["b_conv"],
      params["w_fc1"], params["b_fc1"],
      params["w_ih"], params["w_hh"], params["b_lstm"],
      params["w_head"], params["b_head"])

    prob = head_out[:, :, 0:4]
    value = head_out[:, :, 4:5]
    return prob, mem_out, value


def actor_critic_step(x, hidden, params):
    """Single-step pi()+v() (same semantics as the torch module's per-call forward)."""
    prob, mem, val = actor_critic_rollout(x[None], hidden, params)
    return prob[0], mem[0], val[0]


# --------------------------- Pure-JAX reference --------------------------- #
def reference_rollout(xs, hidden, p):
    """Same math as the kernel (same bf16 weights / cast points), per-step loop."""
    T, B = xs.shape[0], xs.shape[1]
    x = jnp.pad(xs.reshape(T, B, 196).astype(jnp.bfloat16), ((0, 0), (0, 0), (0, 60)))
    h, c = hidden[:, :256], hidden[:, 256:]
    probs, mems, vals = [], [], []
    for t in range(T):
        conv = jnp.dot(x[t], p["w_conv"], preferred_element_type=jnp.float32) + p["b_conv"]
        conv = jnp.maximum(conv, 0.0).astype(jnp.bfloat16)
        h1 = jnp.dot(conv, p["w_fc1"], preferred_element_type=jnp.float32) + p["b_fc1"]
        h1 = jnp.maximum(h1, 0.0).astype(jnp.bfloat16)
        gates = (jnp.dot(h1, p["w_ih"], preferred_element_type=jnp.float32)
                 + jnp.dot(h.astype(jnp.bfloat16), p["w_hh"], preferred_element_type=jnp.float32)
                 + p["b_lstm"])
        i_g = jax.nn.sigmoid(gates[:, 0:256])
        f_g = jax.nn.sigmoid(gates[:, 256:512])
        g_g = jnp.tanh(gates[:, 512:768])
        o_g = jax.nn.sigmoid(gates[:, 768:1024])
        c = f_g * c + i_g * g_g
        h = o_g * jnp.tanh(c)
        head = jnp.dot(h.astype(jnp.bfloat16), p["w_head"],
                       preferred_element_type=jnp.float32) + p["b_head"]
        probs.append(jax.nn.softmax(head[:, 0:4], axis=1))
        vals.append(head[:, 4:5])
        mems.append(jnp.concatenate([h, c], axis=1))
    return jnp.stack(probs), jnp.stack(mems), jnp.stack(vals)


if __name__ == "__main__":
    key = jax.random.PRNGKey(0)
    k_x, k_h, k_p = jax.random.split(key, 3)

    T, B = 8, 2
    xs = jax.random.uniform(k_x, (T, B, 7, 7, 4), jnp.float32)        # NHWC PushWorld obs
    hidden = 0.1 * jax.random.normal(k_h, (B, 512), jnp.float32)      # concat(h, c)
    params = init_params(k_p)

    prob, memory, value = actor_critic_rollout(xs, hidden, params)
    jax.block_until_ready((prob, memory, value))

    # sanity check vs pure-JAX reference (same bf16 weights, exact softmax)
    prob_r, mem_r, val_r = reference_rollout(xs, hidden, params)
    assert np.allclose(np.asarray(prob), np.asarray(prob_r), atol=1e-2, rtol=1e-2)
    assert np.allclose(np.asarray(memory), np.asarray(mem_r), atol=1e-2, rtol=1e-2)
    assert np.allclose(np.asarray(value), np.asarray(val_r), atol=1e-2, rtol=1e-2)
    assert np.allclose(np.asarray(prob).sum(axis=-1), 1.0, atol=2e-2)

    print("KERNEL_OK")
</pallas_src>

<mosaic_0001>
module attributes {stable_mosaic.version = 11 : i64} {
  func.func @actor_critic_kernel(%arg0: i32, %arg1: memref<1x2x256xbf16, #tpu.memory_space<vmem>>, %arg2: memref<2x512xf32, #tpu.memory_space<vmem>>, %arg3: memref<256x384xbf16, #tpu.memory_space<vmem>>, %arg4: memref<1x384xf32, #tpu.memory_space<vmem>>, %arg5: memref<384x128xbf16, #tpu.memory_space<vmem>>, %arg6: memref<1x128xf32, #tpu.memory_space<vmem>>, %arg7: memref<128x1024xbf16, #tpu.memory_space<vmem>>, %arg8: memref<256x1024xbf16, #tpu.memory_space<vmem>>, %arg9: memref<1x1024xf32, #tpu.memory_space<vmem>>, %arg10: memref<256x128xbf16, #tpu.memory_space<vmem>>, %arg11: memref<1x128xf32, #tpu.memory_space<vmem>>, %arg12: memref<1x2x128xf32, #tpu.memory_space<vmem>>, %arg13: memref<1x2x512xf32, #tpu.memory_space<vmem>>, %arg14: memref<2x512xf32, #tpu.memory_space<vmem>>) attributes {dimension_semantics = [#tpu.dimension_semantics<arbitrary>], iteration_bounds = array<i64: 8>, scalar_prefetch = 0 : i64, scratch_operands = 1 : i64, tpu.core_type = #tpu.core_type<tc>, window_params = [{transform_indices = @transform_0, window_bounds = array<i64: 1, 2, 256>}, {pipeline_mode = #tpu.pipeline_mode<synchronous>, transform_indices = @transform_1, window_bounds = array<i64: 2, 512>}, {pipeline_mode = #tpu.pipeline_mode<synchronous>, transform_indices = @transform_2, window_bounds = array<i64: 256, 384>}, {pipeline_mode = #tpu.pipeline_mode<synchronous>, transform_indices = @transform_3, window_bounds = array<i64: 1, 384>}, {pipeline_mode = #tpu.pipeline_mode<synchronous>, transform_indices = @transform_4, window_bounds = array<i64: 384, 128>}, {pipeline_mode = #tpu.pipeline_mode<synchronous>, transform_indices = @transform_5, window_bounds = array<i64: 1, 128>}, {pipeline_mode = #tpu.pipeline_mode<synchronous>, transform_indices = @transform_6, window_bounds = array<i64: 128, 1024>}, {pipeline_mode = #tpu.pipeline_mode<synchronous>, transform_indices = @transform_7, window_bounds = array<i64: 256, 1024>}, {pipeline_mode = #tpu.pipeline_mode<synchronous>, transform_indices = @transform_8, window_bounds = array<i64: 1, 1024>}, {pipeline_mode = #tpu.pipeline_mode<synchronous>, transform_indices = @transform_9, window_bounds = array<i64: 256, 128>}, {pipeline_mode = #tpu.pipeline_mode<synchronous>, transform_indices = @transform_10, window_bounds = array<i64: 1, 128>}, {transform_indices = @transform_11, window_bounds = array<i64: 1, 2, 128>}, {transform_indices = @transform_12, window_bounds = array<i64: 1, 2, 512>}]} {
    %c0_i32 = arith.constant 0 : i32
    %0 = arith.cmpi eq, %arg0, %c0_i32 : i32
    %1 = arith.extui %0 : i1 to i32
    %c0_i32_0 = arith.constant 0 : i32
    %2 = arith.cmpi ne, %1, %c0_i32_0 : i32
    scf.if %2 {
      %c0_50 = arith.constant 0 : index
      %c0_51 = arith.constant 0 : index
      %92 = vector.load %arg2[%c0_50, %c0_51] : memref<2x512xf32, #tpu.memory_space<vmem>>, vector<2x512xf32>
      %c0_52 = arith.constant 0 : index
      %c0_53 = arith.constant 0 : index
      %93 = vector.load %arg14[%c0_52, %c0_53] : memref<2x512xf32, #tpu.memory_space<vmem>>, vector<2x512xf32>
      tpu.vector_store %arg14[%c0_52, %c0_53], %92 {strides = array<i32>} : memref<2x512xf32, #tpu.memory_space<vmem>>, vector<2x512xf32>,
    } else {
    }
    %c0 = arith.constant 0 : index
    %c0_1 = arith.constant 0 : index
    %c0_2 = arith.constant 0 : index
    %3 = vector.load %arg1[%c0, %c0_1, %c0_2] : memref<1x2x256xbf16, #tpu.memory_space<vmem>>, vector<1x2x256xbf16>
    %4 = vector.shape_cast %3 : vector<1x2x256xbf16> to vector<2x256xbf16>
    %c0_3 = arith.constant 0 : index
    %c0_4 = arith.constant 0 : index
    %5 = vector.load %arg14[%c0_3, %c0_4] : memref<2x512xf32, #tpu.memory_space<vmem>>, vector<2x256xf32>
    %c0_5 = arith.constant 0 : index
    %c256 = arith.constant 256 : index
    %6 = vector.load %arg14[%c0_5, %c256] : memref<2x512xf32, #tpu.memory_space<vmem>>, vector<2x256xf32>
    %c0_6 = arith.constant 0 : index
    %c0_7 = arith.constant 0 : index
    %7 = vector.load %arg3[%c0_6, %c0_7] : memref<256x384xbf16, #tpu.memory_space<vmem>>, vector<256x384xbf16>
    %cst = arith.constant dense<0.000000e+00> : vector<2x384xf32>
    %8 = tpu.matmul %4, %7, %cst {dimension_numbers = #tpu.dot_dimension_numbers<[1], [0], [0], [1], [0, 0, 1, 1], [], []>} : vector<2x256xbf16>, vector<256x384xbf16>, vector<2x384xf32> -> vector<2x384xf32>
    %c0_8 = arith.constant 0 : index
    %c0_9 = arith.constant 0 : index
    %9 = vector.load %arg4[%c0_8, %c0_9] : memref<1x384xf32, #tpu.memory_space<vmem>>, vector<1x384xf32>
    %10 = vector.broadcast %9 : vector<1x384xf32> to vector<2x384xf32>
    %11 = arith.addf %8, %10 : vector<2x384xf32>
    %cst_10 = arith.constant 0.000000e+00 : f32
    %12 = vector.broadcast %cst_10 : f32 to vector<2x384xf32>
    %13 = arith.maximumf %11, %12 : vector<2x384xf32>
    %14 = arith.truncf %13 : vector<2x384xf32> to vector<2x384xbf16>
    %c0_11 = arith.constant 0 : index
    %c0_12 = arith.constant 0 : index
    %15 = vector.load %arg5[%c0_11, %c0_12] : memref<384x128xbf16, #tpu.memory_space<vmem>>, vector<384x128xbf16>
    %cst_13 = arith.constant dense<0.000000e+00> : vector<2x128xf32>
    %16 = tpu.matmul %14, %15, %cst_13 {dimension_numbers = #tpu.dot_dimension_numbers<[1], [0], [0], [1], [0, 0, 1, 1], [], []>} : vector<2x384xbf16>, vector<384x128xbf16>, vector<2x128xf32> -> vector<2x128xf32>
    %c0_14 = arith.constant 0 : index
    %c0_15 = arith.constant 0 : index
    %17 = vector.load %arg6[%c0_14, %c0_15] : memref<1x128xf32, #tpu.memory_space<vmem>>, vector<1x128xf32>
    %18 = vector.broadcast %17 : vector<1x128xf32> to vector<2x128xf32>
    %19 = arith.addf %16, %18 : vector<2x128xf32>
    %cst_16 = arith.constant 0.000000e+00 : f32
    %20 = vector.broadcast %cst_16 : f32 to vector<2x128xf32>
    %21 = arith.maximumf %19, %20 : vector<2x128xf32>
    %22 = arith.truncf %21 : vector<2x128xf32> to vector<2x128xbf16>
    %c0_17 = arith.constant 0 : index
    %c0_18 = arith.constant 0 : index
    %23 = vector.load %arg7[%c0_17, %c0_18] : memref<128x1024xbf16, #tpu.memory_space<vmem>>, vector<128x1024xbf16>
    %cst_19 = arith.constant dense<0.000000e+00> : vector<2x1024xf32>
    %24 = tpu.matmul %22, %23, %cst_19 {dimension_numbers = #tpu.dot_dimension_numbers<[1], [0], [0], [1], [0, 0, 1, 1], [], []>} : vector<2x128xbf16>, vector<128x1024xbf16>, vector<2x1024xf32> -> vector<2x1024xf32>
    %25 = arith.truncf %5 : vector<2x256xf32> to vector<2x256xbf16>
    %c0_20 = arith.constant 0 : index
    %c0_21 = arith.constant 0 : index
    %26 = vector.load %arg8[%c0_20, %c0_21] : memref<256x1024xbf16, #tpu.memory_space<vmem>>, vector<256x1024xbf16>
    %cst_22 = arith.constant dense<0.000000e+00> : vector<2x1024xf32>
    %27 = tpu.matmul %25, %26, %cst_22 {dimension_numbers = #tpu.dot_dimension_numbers<[1], [0], [0], [1], [0, 0, 1, 1], [], []>} : vector<2x256xbf16>, vector<256x1024xbf16>, vector<2x1024xf32> -> vector<2x1024xf32>
    %28 = arith.addf %24, %27 : vector<2x1024xf32>
    %c0_23 = arith.constant 0 : index
    %c0_24 = arith.constant 0 : index
    %29 = vector.load %arg9[%c0_23, %c0_24] : memref<1x1024xf32, #tpu.memory_space<vmem>>, vector<1x1024xf32>
    %30 = vector.broadcast %29 : vector<1x1024xf32> to vector<2x1024xf32>
    %31 = arith.addf %28, %30 : vector<2x1024xf32>
    %32 = vector.extract_strided_slice %31 {offsets = [0, 0], sizes = [2, 256], strides = [1, 1]} : vector<2x1024xf32> to vector<2x256xf32>
    %33 = arith.negf %32 : vector<2x256xf32>
    %34 = math.exp %33 : vector<2x256xf32>
    %cst_25 = arith.constant 1.000000e+00 : f32
    %35 = vector.broadcast %cst_25 : f32 to vector<2x256xf32>
    %36 = arith.addf %35, %34 : vector<2x256xf32>
    %37 = arith.divf %35, %36 : vector<2x256xf32>
    %38 = vector.extract_strided_slice %31 {offsets = [0, 256], sizes = [2, 256], strides = [1, 1]} : vector<2x1024xf32> to vector<2x256xf32>
    %39 = arith.negf %38 : vector<2x256xf32>
    %40 = math.exp %39 : vector<2x256xf32>
    %cst_26 = arith.constant 1.000000e+00 : f32
    %41 = vector.broadcast %cst_26 : f32 to vector<2x256xf32>
    %42 = arith.addf %41, %40 : vector<2x256xf32>
    %43 = arith.divf %41, %42 : vector<2x256xf32>
    %44 = vector.extract_strided_slice %31 {offsets = [0, 512], sizes = [2, 256], strides = [1, 1]} : vector<2x1024xf32> to vector<2x256xf32>
    %45 = math.tanh %44 : vector<2x256xf32>
    %46 = vector.extract_strided_slice %31 {offsets = [0, 768], sizes = [2, 256], strides = [1, 1]} : vector<2x1024xf32> to vector<2x256xf32>
    %47 = arith.negf %46 : vector<2x256xf32>
    %48 = math.exp %47 : vector<2x256xf32>
    %cst_27 = arith.constant 1.000000e+00 : f32
    %49 = vector.broadcast %cst_27 : f32 to vector<2x256xf32>
    %50 = arith.addf %49, %48 : vector<2x256xf32>
    %51 = arith.divf %49, %50 : vector<2x256xf32>
    %52 = arith.mulf %43, %6 : vector<2x256xf32>
    %53 = arith.mulf %37, %45 : vector<2x256xf32>
    %54 = arith.addf %52, %53 : vector<2x256xf32>
    %55 = math.tanh %54 : vector<2x256xf32>
    %56 = arith.mulf %51, %55 : vector<2x256xf32>
    %c0_28 = arith.constant 0 : index
    %c0_29 = arith.constant 0 : index
    %57 = vector.load %arg14[%c0_28, %c0_29] : memref<2x512xf32, #tpu.memory_space<vmem>>, vector<2x256xf32>
    tpu.vector_store %arg14[%c0_28, %c0_29], %56 {strides = array<i32>} : memref<2x512xf32, #tpu.memory_space<vmem>>, vector<2x256xf32>,
    %c0_30 = arith.constant 0 : index
    %c256_31 = arith.constant 256 : index
    %58 = vector.load %arg14[%c0_30, %c256_31] : memref<2x512xf32, #tpu.memory_space<vmem>>, vector<2x256xf32>
    tpu.vector_store %arg14[%c0_30, %c256_31], %54 {strides = array<i32>} : memref<2x512xf32, #tpu.memory_space<vmem>>, vector<2x256xf32>,
    %c0_32 = arith.constant 0 : index
    %c0_33 = arith.constant 0 : index
    %c0_34 = arith.constant 0 : index
    %59 = vector.load %arg13[%c0_32, %c0_33, %c0_34] : memref<1x2x512xf32, #tpu.memory_space<vmem>>, vector<1x2x256xf32>
    %60 = vector.shape_cast %59 : vector<1x2x256xf32> to vector<2x256xf32>
    %61 = vector.shape_cast %56 : vector<2x256xf32> to vector<1x2x256xf32>
    tpu.vector_store %arg13[%c0_32, %c0_33, %c0_34], %61 {strides = array<i32>} : memref<1x2x512xf32, #tpu.memory_space<vmem>>, vector<1x2x256xf32>,
    %c0_35 = arith.constant 0 : index
    %c0_36 = arith.constant 0 : index
    %c256_37 = arith.constant 256 : index
    %62 = vector.load %arg13[%c0_35, %c0_36, %c256_37] : memref<1x2x512xf32, #tpu.memory_space<vmem>>, vector<1x2x256xf32>
    %63 = vector.shape_cast %62 : vector<1x2x256xf32> to vector<2x256xf32>
    %64 = vector.shape_cast %54 : vector<2x256xf32> to vector<1x2x256xf32>
    tpu.vector_store %arg13[%c0_35, %c0_36, %c256_37], %64 {strides = array<i32>} : memref<1x2x512xf32, #tpu.memory_space<vmem>>, vector<1x2x256xf32>,
    %65 = arith.truncf %56 : vector<2x256xf32> to vector<2x256xbf16>
    %c0_38 = arith.constant 0 : index
    %c0_39 = arith.constant 0 : index
    %66 = vector.load %arg10[%c0_38, %c0_39] : memref<256x128xbf16, #tpu.memory_space<vmem>>, vector<256x128xbf16>
    %cst_40 = arith.constant dense<0.000000e+00> : vector<2x128xf32>
    %67 = tpu.matmul %65, %66, %cst_40 {dimension_numbers = #tpu.dot_dimension_numbers<[1], [0], [0], [1], [0, 0, 1, 1], [], []>} : vector<2x256xbf16>, vector<256x128xbf16>, vector<2x128xf32> -> vector<2x128xf32>
    %c0_41 = arith.constant 0 : index
    %c0_42 = arith.constant 0 : index
    %68 = vector.load %arg11[%c0_41, %c0_42] : memref<1x128xf32, #tpu.memory_space<vmem>>, vector<1x128xf32>
    %69 = vector.broadcast %68 : vector<1x128xf32> to vector<2x128xf32>
    %70 = arith.addf %67, %69 : vector<2x128xf32>
    %71 = tpu.iota {dimensions = array<i32: 1>} : vector<2x128xi32>
    %c4_i32 = arith.constant 4 : i32
    %72 = vector.broadcast %c4_i32 : i32 to vector<2x128xi32>
    %73 = arith.cmpi slt, %71, %72 : vector<2x128xi32>
    %cst_43 = arith.constant -1.000000e+30 : f32
    %74 = vector.broadcast %cst_43 : f32 to vector<2x128xf32>
    %75 = arith.select %73, %70, %74 : vector<2x128xi1>, vector<2x128xf32>
    %cst_44 = arith.constant dense<0xFF800000> : vector<2xf32>
    %76 = vector.multi_reduction <maximumf>, %75, %cst_44 [1] : vector<2x128xf32> to vector<2xf32>
    %77 = vector.shape_cast %76 : vector<2xf32> to vector<2x1xf32>
    %78 = vector.broadcast %77 : vector<2x1xf32> to vector<2x128xf32>
    %79 = arith.subf %75, %78 : vector<2x128xf32>
    %80 = math.exp %79 : vector<2x128xf32>
    %cst_45 = arith.constant 0.000000e+00 : f32
    %81 = vector.broadcast %cst_45 : f32 to vector<2x128xf32>
    %82 = arith.select %73, %80, %81 : vector<2x128xi1>, vector<2x128xf32>
    %cst_46 = arith.constant dense<0.000000e+00> : vector<2xf32>
    %83 = vector.multi_reduction <add>, %82, %cst_46 [1] : vector<2x128xf32> to vector<2xf32>
    %84 = vector.shape_cast %83 : vector<2xf32> to vector<2x1xf32>
    %85 = tpu.reciprocal %84 {approx = true} : vector<2x1xf32> -> vector<2x1xf32>
    %86 = vector.broadcast %85 : vector<2x1xf32> to vector<2x128xf32>
    %87 = arith.mulf %82, %86 : vector<2x128xf32>
    %88 = arith.select %73, %87, %70 : vector<2x128xi1>, vector<2x128xf32>
    %c0_47 = arith.constant 0 : index
    %c0_48 = arith.constant 0 : index
    %c0_49 = arith.constant 0 : index
    %89 = vector.load %arg12[%c0_47, %c0_48, %c0_49] : memref<1x2x128xf32, #tpu.memory_space<vmem>>, vector<1x2x128xf32>
    %90 = vector.shape_cast %89 : vector<1x2x128xf32> to vector<2x128xf32>
    %91 = vector.shape_cast %88 : vector<2x128xf32> to vector<1x2x128xf32>
    tpu.vector_store %arg12[%c0_47, %c0_48, %c0_49], %91 {strides = array<i32>} : memref<1x2x128xf32, #tpu.memory_space<vmem>>, vector<1x2x128xf32>,
    return
  }
  func.func @transform_0(%arg0: i32) -> (i32, i32, i32) {
    %c0_i32 = arith.constant 0 : i32
    %c0_i32_0 = arith.constant 0 : i32
    %c0_i32_1 = arith.constant 0 : i32
    return %arg0, %c0_i32, %c0_i32_0 : i32, i32, i32
  }
  func.func @transform_1(%arg0: i32) -> (i32, i32) {
    %c0_i32 = arith.constant 0 : i32
    %c0_i32_0 = arith.constant 0 : i32
    %c0_i32_1 = arith.constant 0 : i32
    return %c0_i32, %c0_i32_0 : i32, i32
  }
  func.func @transform_2(%arg0: i32) -> (i32, i32) {
    %c0_i32 = arith.constant 0 : i32
    %c0_i32_0 = arith.constant 0 : i32
    %c0_i32_1 = arith.constant 0 : i32
    return %c0_i32, %c0_i32_0 : i32, i32
  }
  func.func @transform_3(%arg0: i32) -> (i32, i32) {
    %c0_i32 = arith.constant 0 : i32
    %c0_i32_0 = arith.constant 0 : i32
    %c0_i32_1 = arith.constant 0 : i32
    return %c0_i32, %c0_i32_0 : i32, i32
  }
  func.func @transform_4(%arg0: i32) -> (i32, i32) {
    %c0_i32 = arith.constant 0 : i32
    %c0_i32_0 = arith.constant 0 : i32
    %c0_i32_1 = arith.constant 0 : i32
    return %c0_i32, %c0_i32_0 : i32, i32
  }
  func.func @transform_5(%arg0: i32) -> (i32, i32) {
    %c0_i32 = arith.constant 0 : i32
    %c0_i32_0 = arith.constant 0 : i32
    %c0_i32_1 = arith.constant 0 : i32
    return %c0_i32, %c0_i32_0 : i32, i32
  }
  func.func @transform_6(%arg0: i32) -> (i32, i32) {
    %c0_i32 = arith.constant 0 : i32
    %c0_i32_0 = arith.constant 0 : i32
    %c0_i32_1 = arith.constant 0 : i32
    return %c0_i32, %c0_i32_0 : i32, i32
  }
  func.func @transform_7(%arg0: i32) -> (i32, i32) {
    %c0_i32 = arith.constant 0 : i32
    %c0_i32_0 = arith.constant 0 : i32
    %c0_i32_1 = arith.constant 0 : i32
    return %c0_i32, %c0_i32_0 : i32, i32
  }
  func.func @transform_8(%arg0: i32) -> (i32, i32) {
    %c0_i32 = arith.constant 0 : i32
    %c0_i32_0 = arith.constant 0 : i32
    %c0_i32_1 = arith.constant 0 : i32
    return %c0_i32, %c0_i32_0 : i32, i32
  }
  func.func @transform_9(%arg0: i32) -> (i32, i32) {
    %c0_i32 = arith.constant 0 : i32
    %c0_i32_0 = arith.constant 0 : i32
    %c0_i32_1 = arith.constant 0 : i32
    return %c0_i32, %c0_i32_0 : i32, i32
  }
  func.func @transform_10(%arg0: i32) -> (i32, i32) {
    %c0_i32 = arith.constant 0 : i32
    %c0_i32_0 = arith.constant 0 : i32
    %c0_i32_1 = arith.constant 0 : i32
    return %c0_i32, %c0_i32_0 : i32, i32
  }
  func.func @transform_11(%arg0: i32) -> (i32, i32, i32) {
    %c0_i32 = arith.constant 0 : i32
    %c0_i32_0 = arith.constant 0 : i32
    %c0_i32_1 = arith.constant 0 : i32
    return %arg0, %c0_i32, %c0_i32_0 : i32, i32, i32
  }
  func.func @transform_12(%arg0: i32) -> (i32, i32, i32) {
    %c0_i32 = arith.constant 0 : i32
    %c0_i32_0 = arith.constant 0 : i32
    %c0_i32_1 = arith.constant 0 : i32
    return %arg0, %c0_i32, %c0_i32_0 : i32, i32, i32
  }
}

</mosaic_0001>

<llo_original>
// kernel: tpu_custom_call.1
$region0: #{tpu_custom_call.1}
  #allocation0 [shape = 'u32[]', space=smem, size = 0x4, offset = 0x4, fixed_abs, tag = 'smem constant byte address 0x4 - core index']
  #allocation1 [shape = 'u32[72,128]{1,0:T(1,128)}', space=vmem, size = 0x9000, scoped, tag = 'internal scratch']
  #allocation2 [shape = 'f32[2,512]{1,0:T(2,128)}', space=vmem, size = 0x1000, scoped, tag = 'scratch operand']
  %s0 = inlined_call_operand.hbm [shape: bf16[8,2,256], index: 0, kind: input, shape index: {}]
  %s1 = inlined_call_operand.hbm [shape: f32[2,512], index: 1, kind: input, shape index: {}]
  %s2 = inlined_call_operand.hbm [shape: bf16[256,384], index: 2, kind: input, shape index: {}]
  %s3 = inlined_call_operand.hbm [shape: f32[1,384], index: 3, kind: input, shape index: {}]
  %s4 = inlined_call_operand.hbm [shape: bf16[384,128], index: 4, kind: input, shape index: {}]
  %s5 = inlined_call_operand.vmem [shape: f32[1,128], index: 5, kind: input, shape index: {}]
  %s6 = inlined_call_operand.hbm [shape: bf16[128,1024], index: 6, kind: input, shape index: {}]
  %s7 = inlined_call_operand.hbm [shape: bf16[256,1024], index: 7, kind: input, shape index: {}]
  %s8 = inlined_call_operand.hbm [shape: f32[1,1024], index: 8, kind: input, shape index: {}]
  %s9 = inlined_call_operand.hbm [shape: bf16[256,128], index: 9, kind: input, shape index: {}]
  %s10 = inlined_call_operand.vmem [shape: f32[1,128], index: 10, kind: input, shape index: {}]
  %s11 = inlined_call_operand.hbm [shape: f32[8,2,128], index: 11, kind: output, shape index: {0}]
  %s12 = inlined_call_operand.hbm [shape: f32[8,2,512], index: 12, kind: output, shape index: {1}]
  %13 = xla_tuple %s11, %s12
  %s14 = sld [smem:[#allocation0]]
  $region125: #{tpu_custom_call.1} parent=0
    _
  %s16 = ssub.s32 1, %s14
  %s17 = scalar_select 0, %s16, %s14
  $region1: #{tpu_custom_call.1} parent=0
    #allocation3 [shape = 'u8[2048]{0}', space=vmem, size = 0x800, scoped, tag = 'input window, operand 0']
    #allocation4 [shape = 's32[2]{0}', space=sflag, size = 0x8, scoped, tag = 'scoped memory for tpu_custom_call.1']
    #allocation5 [shape = 's32[2]{0}', space=sflag, size = 0x8, scoped, tag = 'scoped memory for tpu_custom_call.1']
    #allocation6 [shape = 'u8[4096]{0}', space=vmem, size = 0x1000, scoped, tag = 'input window, operand 1, single buffered']
    #allocation7 [shape = 's32[1]{0}', space=sflag, size = 0x4, scoped, tag = 'scoped memory for tpu_custom_call.1']
    #allocation8 [shape = 'u8[196608]{0}', space=vmem, size = 0x30000, scoped, tag = 'input window, operand 2, single buffered']
    #allocation9 [shape = 'u8[1536]{0}', space=vmem, size = 0x800, scoped, tag = 'input window, operand 3, single buffered']
    #allocation10 [shape = 's32[1]{0}', space=sflag, size = 0x4, scoped, tag = 'scoped memory for tpu_custom_call.1']
    #allocation11 [shape = 'u8[98304]{0}', space=vmem, size = 0x18000, scoped, tag = 'input window, operand 4, single buffered']
    #allocation12 [shape = 'u8[262144]{0}', space=vmem, size = 0x40000, scoped, tag = 'input window, operand 6, single buffered']
    #allocation13 [shape = 's32[1]{0}', space=sflag, size = 0x4, scoped, tag = 'scoped memory for tpu_custom_call.1']
    #allocation14 [shape = 'u8[524288]{0}', space=vmem, size = 0x80000, scoped, tag = 'input window, operand 7, single buffered']
    #allocation15 [shape = 'u8[4096]{0}', space=vmem, size = 0x1000, scoped, tag = 'input window, operand 8, single buffered']
    #allocation16 [shape = 's32[1]{0}', space=sflag, size = 0x4, scoped, tag = 'scoped memory for tpu_custom_call.1']
    #allocation17 [shape = 'u8[65536]{0}', space=vmem, size = 0x10000, scoped, tag = 'input window, operand 9, single buffered']
    #allocation18 [shape = 'u8[2048]{0}', space=vmem, size = 0x800, scoped, tag = 'output window, operand 0']
    #allocation19 [shape = 'u8[8192]{0}', space=vmem, size = 0x2000, scoped, tag = 'output window, operand 1']
    #allocation20 [shape = 's32[2]{0}', space=sflag, size = 0x8, scoped, tag = 'scoped memory for tpu_custom_call.1']
    %18 = vsyncpa [#allocation4], 0
    %s19 = scalar_lea.sflag [#allocation4], 1
    %20 = vsyncpa %s19, 0
    %21 = vsyncpa [#allocation7], 0
    %22 = vsyncpa [#allocation10], 0
    %23 = vsyncpa [#allocation13], 0
    %24 = vsyncpa [#allocation16], 0
    %25 = vsyncpa [#allocation5], 0
    %s26 = scalar_lea.sflag [#allocation5], 1
    %27 = vsyncpa %s26, 0
    %28 = vsyncpa [#allocation20], 0
    %s29 = scalar_lea.sflag [#allocation20], 1
    %30 = vsyncpa %s29, 0
    loop: start=0, step=1, limit=10
    $region2: #{tpu_custom_call.1} parent=1 // loop_pre_header
      _
    $region3: #{tpu_custom_call.1} parent=1 // loop_header
      %s32 = sphi 0, %s36
      %p33 = scmp.ge.s32.totalorder %s32, 10
      %s42 = sphi 0, %s44
      %s45 = sphi 0, %s42
      %s46 = sphi 0, %s45
      %s62 = sphi 0, %s46
      %s66 = sphi 0, %s66
      %s68 = sphi 0, %s66
      %s69 = sphi 0, %s68
      %s83 = sphi 0, %s69
      %s87 = sphi 0, %s87
      %s89 = sphi 0, %s87
      %s90 = sphi 0, %s89
      %s104 = sphi 0, %s90
      %s108 = sphi 0, %s108
      %s110 = sphi 0, %s108
      %s111 = sphi 0, %s110
      %s125 = sphi 0, %s111
      %s129 = sphi 0, %s129
      %s131 = sphi 0, %s129
      %s132 = sphi 0, %s131
      %s146 = sphi 0, %s132
      %s150 = sphi 0, %s150
      %s152 = sphi 0, %s150
      %s153 = sphi 0, %s152
      %s167 = sphi 0, %s153
      %s171 = sphi 0, %s171
      %s173 = sphi 0, %s171
      %s174 = sphi 0, %s173
      %s188 = sphi 0, %s174
      %s192 = sphi 0, %s192
      %s194 = sphi 0, %s192
      %s195 = sphi 0, %s194
      %s209 = sphi 0, %s195
      %s213 = sphi 0, %s213
      %s215 = sphi 0, %s213
      %s216 = sphi 0, %s215
      %s230 = sphi 0, %s216
      %s234 = sphi 0, %s234
      %s236 = sphi 0, %s234
      %s237 = sphi 0, %s236
      %s251 = sphi 0, %s237
      %s255 = sphi 0, %s255
      %s257 = sphi 0, %s255
      %s258 = sphi 0, %s257
      %s272 = sphi 0, %s258
      %s278 = sphi 0, %s280
      %s281 = sphi 0, %s278
      %s282 = sphi 0, %s281
      %s298 = sphi 0, %s282
      %s304 = sphi 0, %s306
      %s307 = sphi 0, %s304
      %s308 = sphi 0, %s307
      %s324 = sphi 0, %s308
    $region4: #{tpu_custom_call.1} parent=1 // loop_header_branch
      %35 = sbr.rel (%p33) target = $region8
    $region5: #{tpu_custom_call.1} parent=1 // loop_body
      %s37 = ssub.s32 %s32, 1
      %s38 = ssub.s32 %s32, 2
      %s39 = sadd.s32 %s32, 1
      %s40 = ssub.s32 %s32, %s39
      %p41 = scmp.eq.s32.totalorder %s40, 0
      %s43 = sadd.s32 %s42, 1
      %s44 = scalar_select %p41, %s42, %s43
      %p47 = pneg %p41
      %p48 = scmp.eq.s32.totalorder %s32, 7
      %p49 = por %p47, %p48
      %p50 = scmp.ne.s32.totalorder %s42, %s45
      %p51 = scmp.eq.s32.totalorder %s32, 0
      %p52 = por %p50, %p51
      %p53 = scmp.ne.s32.totalorder %s42, %s45
      %p54 = scmp.eq.s32.totalorder %s37, 7
      %p55 = por %p53, %p54
      %p56 = scmp.ne.s32.totalorder %s45, %s46
      %p57 = scmp.eq.s32.totalorder %s37, 0
      %p58 = por %p56, %p57
      %p59 = scmp.ne.s32.totalorder %s45, %s46
      %p60 = scmp.eq.s32.totalorder %s38, 7
      %p61 = por %p59, %p60
      %p63 = scmp.ne.s32.totalorder %s46, %s62
      %p64 = scmp.eq.s32.totalorder %s38, 0
      %p65 = por %p63, %p64
      %s67 = sadd.s32 %s66, 1
      %p70 = scmp.eq.s32.totalorder %s32, 7
      %p71 = scmp.ne.s32.totalorder %s66, %s68
      %p72 = scmp.eq.s32.totalorder %s32, 0
      %p73 = por %p71, %p72
      %p74 = scmp.ne.s32.totalorder %s66, %s68
      %p75 = scmp.eq.s32.totalorder %s37, 7
      %p76 = por %p74, %p75
      %p77 = scmp.ne.s32.totalorder %s68, %s69
      %p78 = scmp.eq.s32.totalorder %s37, 0
      %p79 = por %p77, %p78
      %p80 = scmp.ne.s32.totalorder %s68, %s69
      %p81 = scmp.eq.s32.totalorder %s38, 7
      %p82 = por %p80, %p81
      %p84 = scmp.ne.s32.totalorder %s69, %s83
      %p85 = scmp.eq.s32.totalorder %s38, 0
      %p86 = por %p84, %p85
      %s88 = sadd.s32 %s87, 1
      %p91 = scmp.eq.s32.totalorder %s32, 7
      %p92 = scmp.ne.s32.totalorder %s87, %s89
      %p93 = scmp.eq.s32.totalorder %s32, 0
      %p94 = por %p92, %p93
      %p95 = scmp.ne.s32.totalorder %s87, %s89
      %p96 = scmp.eq.s32.totalorder %s37, 7
      %p97 = por %p95, %p96
      %p98 = scmp.ne.s32.totalorder %s89, %s90
      %p99 = scmp.eq.s32.totalorder %s37, 0
      %p100 = por %p98, %p99
      %p101 = scmp.ne.s32.totalorder %s89, %s90
      %p102 = scmp.eq.s32.totalorder %s38, 7
      %p103 = por %p101, %p102
      %p105 = scmp.ne.s32.totalorder %s90, %s104
      %p106 = scmp.eq.s32.totalorder %s38, 0
      %p107 = por %p105, %p106
      %s109 = sadd.s32 %s108, 1
      %p112 = scmp.eq.s32.totalorder %s32, 7
      %p113 = scmp.ne.s32.totalorder %s108, %s110
      %p114 = scmp.eq.s32.totalorder %s32, 0
      %p115 = por %p113, %p114
      %p116 = scmp.ne.s32.totalorder %s108, %s110
      %p117 = scmp.eq.s32.totalorder %s37, 7
      %p118 = por %p116, %p117
      %p119 = scmp.ne.s32.totalorder %s110, %s111
      %p120 = scmp.eq.s32.totalorder %s37, 0
      %p121 = por %p119, %p120
      %p122 = scmp.ne.s32.totalorder %s110, %s111
      %p123 = scmp.eq.s32.totalorder %s38, 7
      %p124 = por %p122, %p123
      %p126 = scmp.ne.s32.totalorder %s111, %s125
      %p127 = scmp.eq.s32.totalorder %s38, 0
      %p128 = por %p126, %p127
      %s130 = sadd.s32 %s129, 1
      %p133 = scmp.eq.s32.totalorder %s32, 7
      %p134 = scmp.ne.s32.totalorder %s129, %s131
      %p135 = scmp.eq.s32.totalorder %s32, 0
      %p136 = por %p134, %p135
      %p137 = scmp.ne.s32.totalorder %s129, %s131
      %p138 = scmp.eq.s32.totalorder %s37, 7
      %p139 = por %p137, %p138
      %p140 = scmp.ne.s32.totalorder %s131, %s132
      %p141 = scmp.eq.s32.totalorder %s37, 0
      %p142 = por %p140, %p141
      %p143 = scmp.ne.s32.totalorder %s131, %s132
      %p144 = scmp.eq.s32.totalorder %s38, 7
      %p145 = por %p143, %p144
      %p147 = scmp.ne.s32.totalorder %s132, %s146
      %p148 = scmp.eq.s32.totalorder %s38, 0
      %p149 = por %p147, %p148
      %s151 = sadd.s32 %s150, 1
      %p154 = scmp.eq.s32.totalorder %s32, 7
      %p155 = scmp.ne.s32.totalorder %s150, %s152
      %p156 = scmp.eq.s32.totalorder %s32, 0
      %p157 = por %p155, %p156
      %p158 = scmp.ne.s32.totalorder %s150, %s152
      %p159 = scmp.eq.s32.totalorder %s37, 7
      %p160 = por %p158, %p159
      %p161 = scmp.ne.s32.totalorder %s152, %s153
      %p162 = scmp.eq.s32.totalorder %s37, 0
      %p163 = por %p161, %p162
      %p164 = scmp.ne.s32.totalorder %s152, %s153
      %p165 = scmp.eq.s32.totalorder %s38, 7
      %p166 = por %p164, %p165
      %p168 = scmp.ne.s32.totalorder %s153, %s167
      %p169 = scmp.eq.s32.totalorder %s38, 0
      %p170 = por %p168, %p169
      %s172 = sadd.s32 %s171, 1
      %p175 = scmp.eq.s32.totalorder %s32, 7
      %p176 = scmp.ne.s32.totalorder %s171, %s173
      %p177 = scmp.eq.s32.totalorder %s32, 0
      %p178 = por %p176, %p177
      %p179 = scmp.ne.s32.totalorder %s171, %s173
      %p180 = scmp.eq.s32.totalorder %s37, 7
      %p181 = por %p179, %p180
      %p182 = scmp.ne.s32.totalorder %s173, %s174
      %p183 = scmp.eq.s32.totalorder %s37, 0
      %p184 = por %p182, %p183
      %p185 = scmp.ne.s32.totalorder %s173, %s174
      %p186 = scmp.eq.s32.totalorder %s38, 7
      %p187 = por %p185, %p186
      %p189 = scmp.ne.s32.totalorder %s174, %s188
      %p190 = scmp.eq.s32.totalorder %s38, 0
      %p191 = por %p189, %p190
      %s193 = sadd.s32 %s192, 1
      %p196 = scmp.eq.s32.totalorder %s32, 7
      %p197 = scmp.ne.s32.totalorder %s192, %s194
      %p198 = scmp.eq.s32.totalorder %s32, 0
      %p199 = por %p197, %p198
      %p200 = scmp.ne.s32.totalorder %s192, %s194
      %p201 = scmp.eq.s32.totalorder %s37, 7
      %p202 = por %p200, %p201
      %p203 = scmp.ne.s32.totalorder %s194, %s195
      %p204 = scmp.eq.s32.totalorder %s37, 0
      %p205 = por %p203, %p204
      %p206 = scmp.ne.s32.totalorder %s194, %s195
      %p207 = scmp.eq.s32.totalorder %s38, 7
      %p208 = por %p206, %p207
      %p210 = scmp.ne.s32.totalorder %s195, %s209
      %p211 = scmp.eq.s32.totalorder %s38, 0
      %p212 = por %p210, %p211
      %s214 = sadd.s32 %s213, 1
      %p217 = scmp.eq.s32.totalorder %s32, 7
      %p218 = scmp.ne.s32.totalorder %s213, %s215
      %p219 = scmp.eq.s32.totalorder %s32, 0
      %p220 = por %p218, %p219
      %p221 = scmp.ne.s32.totalorder %s213, %s215
      %p222 = scmp.eq.s32.totalorder %s37, 7
      %p223 = por %p221, %p222
      %p224 = scmp.ne.s32.totalorder %s215, %s216
      %p225 = scmp.eq.s32.totalorder %s37, 0
      %p226 = por %p224, %p225
      %p227 = scmp.ne.s32.totalorder %s215, %s216
      %p228 = scmp.eq.s32.totalorder %s38, 7
      %p229 = por %p227, %p228
      %p231 = scmp.ne.s32.totalorder %s216, %s230
      %p232 = scmp.eq.s32.totalorder %s38, 0
      %p233 = por %p231, %p232
      %s235 = sadd.s32 %s234, 1
      %p238 = scmp.eq.s32.totalorder %s32, 7
      %p239 = scmp.ne.s32.totalorder %s234, %s236
      %p240 = scmp.eq.s32.totalorder %s32, 0
      %p241 = por %p239, %p240
      %p242 = scmp.ne.s32.totalorder %s234, %s236
      %p243 = scmp.eq.s32.totalorder %s37, 7
      %p244 = por %p242, %p243
      %p245 = scmp.ne.s32.totalorder %s236, %s237
      %p246 = scmp.eq.s32.totalorder %s37, 0
      %p247 = por %p245, %p246
      %p248 = scmp.ne.s32.totalorder %s236, %s237
      %p249 = scmp.eq.s32.totalorder %s38, 7
      %p250 = por %p248, %p249
      %p252 = scmp.ne.s32.totalorder %s237, %s251
      %p253 = scmp.eq.s32.totalorder %s38, 0
      %p254 = por %p252, %p253
      %s256 = sadd.s32 %s255, 1
      %p259 = scmp.eq.s32.totalorder %s32, 7
      %p260 = scmp.ne.s32.totalorder %s255, %s257
      %p261 = scmp.eq.s32.totalorder %s32, 0
      %p262 = por %p260, %p261
      %p263 = scmp.ne.s32.totalorder %s255, %s257
      %p264 = scmp.eq.s32.totalorder %s37, 7
      %p265 = por %p263, %p264
      %p266 = scmp.ne.s32.totalorder %s257, %s258
      %p267 = scmp.eq.s32.totalorder %s37, 0
      %p268 = por %p266, %p267
      %p269 = scmp.ne.s32.totalorder %s257, %s258
      %p270 = scmp.eq.s32.totalorder %s38, 7
      %p271 = por %p269, %p270
      %p273 = scmp.ne.s32.totalorder %s258, %s272
      %p274 = scmp.eq.s32.totalorder %s38, 0
      %p275 = por %p273, %p274
      %s276 = ssub.s32 %s32, %s39
      %p277 = scmp.eq.s32.totalorder %s276, 0
      %s279 = sadd.s32 %s278, 1
      %s280 = scalar_select %p277, %s278, %s279
      %p283 = pneg %p277
      %p284 = scmp.eq.s32.totalorder %s32, 7
      %p285 = por %p283, %p284
      %p286 = scmp.ne.s32.totalorder %s278, %s281
      %p287 = scmp.eq.s32.totalorder %s32, 0
      %p288 = por %p286, %p287
      %p289 = scmp.ne.s32.totalorder %s278, %s281
      %p290 = scmp.eq.s32.totalorder %s37, 7
      %p291 = por %p289, %p290
      %p292 = scmp.ne.s32.totalorder %s281, %s282
      %p293 = scmp.eq.s32.totalorder %s37, 0
      %p294 = por %p292, %p293
      %p295 = scmp.ne.s32.totalorder %s281, %s282
      %p296 = scmp.eq.s32.totalorder %s38, 7
      %p297 = por %p295, %p296
      %p299 = scmp.ne.s32.totalorder %s282, %s298
      %p300 = scmp.eq.s32.totalorder %s38, 0
      %p301 = por %p299, %p300
      %s302 = ssub.s32 %s32, %s39
      %p303 = scmp.eq.s32.totalorder %s302, 0
      %s305 = sadd.s32 %s304, 1
      %s306 = scalar_select %p303, %s304, %s305
      %p309 = pneg %p303
      %p310 = scmp.eq.s32.totalorder %s32, 7
      %p311 = por %p309, %p310
      %p312 = scmp.ne.s32.totalorder %s304, %s307
      %p313 = scmp.eq.s32.totalorder %s32, 0
      %p314 = por %p312, %p313
      %p315 = scmp.ne.s32.totalorder %s304, %s307
      %p316 = scmp.eq.s32.totalorder %s37, 7
      %p317 = por %p315, %p316
      %p318 = scmp.ne.s32.totalorder %s307, %s308
      %p319 = scmp.eq.s32.totalorder %s37, 0
      %p320 = por %p318, %p319
      %p321 = scmp.ne.s32.totalorder %s307, %s308
      %p322 = scmp.eq.s32.totalorder %s38, 7
      %p323 = por %p321, %p322
      %p325 = scmp.ne.s32.totalorder %s308, %s324
      %p326 = scmp.eq.s32.totalorder %s38, 0
      %p327 = por %p325, %p326
      %p328 = scmp.le.s32.totalorder 1, %s32
      %p329 = scmp.lt.s32.totalorder %s32, 9
      %p330 = pnand %p328, %p329
      %p331 = pneg %p330
      // Predicated region
      $region9: #{tpu_custom_call.1} parent=5 // pred_check
        _
      $region10: #{tpu_custom_call.1} parent=5 // pred_check_branch
        %333 = sbr.rel (%p330) target = $region12
      $region11: #{tpu_custom_call.1} parent=5 // pred_region
        %s334 = ssub.s32 %s32, 1
        // Predicated region
        $region13: #{tpu_custom_call.1} parent=11 // pred_check
          %p335 = pneg %p79
        $region14: #{tpu_custom_call.1} parent=11 // pred_check_branch
          %337 = sbr.rel (%p335) target = $region16
        $region15: #{tpu_custom_call.1} parent=11 // pred_region
          %339 = vsyncadd [#allocation7], 0
          %s341 = sshll.u32 %s1, 4
          %s342 = int_to_ptr.hbm [resolvable:$true] %s341
          %s343 = sshll.u32 [#allocation6], 4
          %s344 = int_to_ptr.vmem [resolvable:$true] %s343
          %346 = dma.hbm_to_vmem [thread:$0]  %s342, 128, %s344, [#allocation7]
        $region16: #{tpu_custom_call.1} parent=11 // pred_fallthru
          _
        // Predicated region
        $region17: #{tpu_custom_call.1} parent=11 // pred_check
          %p347 = pneg %p100
        $region18: #{tpu_custom_call.1} parent=11 // pred_check_branch
          %349 = sbr.rel (%p347) target = $region20
        $region19: #{tpu_custom_call.1} parent=11 // pred_region
          %351 = vsyncadd [#allocation7], 0
          %s352 = sshll.u32 %s2, 4
          %s353 = int_to_ptr.hbm [resolvable:$true] %s352
          %s354 = sshll.u32 [#allocation8], 4
          %s355 = int_to_ptr.vmem [resolvable:$true] %s354
          %360 = dma.hbm_to_vmem [thread:$0]  %s353, 6144, %s355, [#allocation7], 192, 192, 12
        $region20: #{tpu_custom_call.1} parent=11 // pred_fallthru
          _
        // Predicated region
        $region21: #{tpu_custom_call.1} parent=11 // pred_check
          %p361 = pneg %p121
        $region22: #{tpu_custom_call.1} parent=11 // pred_check_branch
          %363 = sbr.rel (%p361) target = $region24
        $region23: #{tpu_custom_call.1} parent=11 // pred_region
          %365 = vsyncadd [#allocation10], 0
          %s367 = sshll.u32 %s3, 4
          %s368 = int_to_ptr.hbm [resolvable:$true] %s367
          %s369 = sshll.u32 [#allocation9], 4
          %s370 = int_to_ptr.vmem [resolvable:$true] %s369
          %372 = dma.hbm_to_vmem [thread:$0]  %s368, 48, %s370, [#allocation10]
        $region24: #{tpu_custom_call.1} parent=11 // pred_fallthru
          _
        // Predicated region
        $region25: #{tpu_custom_call.1} parent=11 // pred_check
          %p373 = pneg %p142
        $region26: #{tpu_custom_call.1} parent=11 // pred_check_branch
          %375 = sbr.rel (%p373) target = $region28
        $region27: #{tpu_custom_call.1} parent=11 // pred_region
          %377 = vsyncadd [#allocation10], 0
          %s378 = sshll.u32 %s4, 4
          %s379 = int_to_ptr.hbm [resolvable:$true] %s378
          %s380 = sshll.u32 [#allocation11], 4
          %s381 = int_to_ptr.vmem [resolvable:$true] %s380
          %386 = dma.hbm_to_vmem [thread:$0]  %s379, 3072, %s381, [#allocation10], 64, 64, 4
        $region28: #{tpu_custom_call.1} parent=11 // pred_fallthru
          _
        // Predicated region
        $region29: #{tpu_custom_call.1} parent=11 // pred_check
          %p387 = pneg %p163
        $region30: #{tpu_custom_call.1} parent=11 // pred_check_branch
          %389 = sbr.rel (%p387) target = $region32
        $region31: #{tpu_custom_call.1} parent=11 // pred_region
          _
        $region32: #{tpu_custom_call.1} parent=11 // pred_fallthru
          _
        // Predicated region
        $region33: #{tpu_custom_call.1} parent=11 // pred_check
          %p390 = pneg %p184
        $region34: #{tpu_custom_call.1} parent=11 // pred_check_branch
          %392 = sbr.rel (%p390) target = $region36
        $region35: #{tpu_custom_call.1} parent=11 // pred_region
          %394 = vsyncadd [#allocation13], 0
          %s395 = sshll.u32 %s6, 4
          %s396 = int_to_ptr.hbm [resolvable:$true] %s395
          %s397 = sshll.u32 [#allocation12], 4
          %s398 = int_to_ptr.vmem [resolvable:$true] %s397
          %403 = dma.hbm_to_vmem [thread:$0]  %s396, 8192, %s398, [#allocation13], 512, 512, 32
        $region36: #{tpu_custom_call.1} parent=11 // pred_fallthru
          _
        // Predicated region
        $region37: #{tpu_custom_call.1} parent=11 // pred_check
          %p404 = pneg %p205
        $region38: #{tpu_custom_call.1} parent=11 // pred_check_branch
          %406 = sbr.rel (%p404) target = $region40
        $region39: #{tpu_custom_call.1} parent=11 // pred_region
          %408 = vsyncadd [#allocation13], 0
          %s409 = sshll.u32 %s7, 4
          %s410 = int_to_ptr.hbm [resolvable:$true] %s409
          %s411 = sshll.u32 [#allocation14], 4
          %s412 = int_to_ptr.vmem [resolvable:$true] %s411
          %417 = dma.hbm_to_vmem [thread:$0]  %s410, 16384, %s412, [#allocation13], 512, 512, 32
        $region40: #{tpu_custom_call.1} parent=11 // pred_fallthru
          _
        // Predicated region
        $region41: #{tpu_custom_call.1} parent=11 // pred_check
          %p418 = pneg %p226
        $region42: #{tpu_custom_call.1} parent=11 // pred_check_branch
          %420 = sbr.rel (%p418) target = $region44
        $region43: #{tpu_custom_call.1} parent=11 // pred_region
          %422 = vsyncadd [#allocation16], 0
          %s424 = sshll.u32 %s8, 4
          %s425 = int_to_ptr.hbm [resolvable:$true] %s424
          %s426 = sshll.u32 [#allocation15], 4
          %s427 = int_to_ptr.vmem [resolvable:$true] %s426
          %429 = dma.hbm_to_vmem [thread:$0]  %s425, 128, %s427, [#allocation16]
        $region44: #{tpu_custom_call.1} parent=11 // pred_fallthru
          _
        // Predicated region
        $region45: #{tpu_custom_call.1} parent=11 // pred_check
          %p430 = pneg %p247
        $region46: #{tpu_custom_call.1} parent=11 // pred_check_branch
          %432 = sbr.rel (%p430) target = $region48
        $region47: #{tpu_custom_call.1} parent=11 // pred_region
          %434 = vsyncadd [#allocation16], 0
          %s435 = sshll.u32 %s9, 4
          %s436 = int_to_ptr.hbm [resolvable:$true] %s435
          %s437 = sshll.u32 [#allocation17], 4
          %s438 = int_to_ptr.vmem [resolvable:$true] %s437
          %443 = dma.hbm_to_vmem [thread:$0]  %s436, 2048, %s438, [#allocation16], 64, 64, 4
        $region48: #{tpu_custom_call.1} parent=11 // pred_fallthru
          _
        // Predicated region
        $region49: #{tpu_custom_call.1} parent=11 // pred_check
          %p444 = pneg %p268
        $region50: #{tpu_custom_call.1} parent=11 // pred_check_branch
          %446 = sbr.rel (%p444) target = $region52
        $region51: #{tpu_custom_call.1} parent=11 // pred_region
          _
        $region52: #{tpu_custom_call.1} parent=11 // pred_fallthru
          _
      $region12: #{tpu_custom_call.1} parent=5 // pred_fallthru
        _
      %p447 = scmp.lt.s32.totalorder %s32, 8
      // Predicated region
      $region53: #{tpu_custom_call.1} parent=5 // pred_check
        %p448 = pneg %p447
      $region54: #{tpu_custom_call.1} parent=5 // pred_check_branch
        %450 = sbr.rel (%p448) target = $region56
      $region55: #{tpu_custom_call.1} parent=5 // pred_region
        // Predicated region
        $region57: #{tpu_custom_call.1} parent=55 // pred_check
          %p451 = pneg %p52
        $region58: #{tpu_custom_call.1} parent=55 // pred_check_branch
          %453 = sbr.rel (%p451) target = $region60
        $region59: #{tpu_custom_call.1} parent=55 // pred_region
          %s454 = sand.u32 %s42, 1
          %s455 = scalar_lea.sflag [#allocation4], %s454
          %s456 = sand.u32 %s42, 1
          %s457 = smul.addr %s456, 2
          %s458 = scalar_lea.vmem [#allocation3], %s457
          %460 = vsyncadd %s455, 0
          %s461 = smul.addr %s32, 2
          %s462 = scalar_lea.hbm %s0, %s461
          %s464 = sshll.u32 %s462, 4
          %s465 = int_to_ptr.hbm [resolvable:$true] %s464
          %s466 = sshll.u32 %s458, 4
          %s467 = int_to_ptr.vmem [resolvable:$true] %s466
          %469 = dma.hbm_to_vmem [thread:$0]  %s465, 32, %s467, %s455
        $region60: #{tpu_custom_call.1} parent=55 // pred_fallthru
          _
      $region56: #{tpu_custom_call.1} parent=5 // pred_fallthru
        _
      %p470 = scmp.le.s32.totalorder 1, %s32
      %p471 = scmp.lt.s32.totalorder %s32, 9
      %p472 = pnand %p470, %p471
      %p473 = pneg %p472
      // Predicated region
      $region61: #{tpu_custom_call.1} parent=5 // pred_check
        _
      $region62: #{tpu_custom_call.1} parent=5 // pred_check_branch
        %475 = sbr.rel (%p472) target = $region64
      $region63: #{tpu_custom_call.1} parent=5 // pred_region
        %s476 = ssub.s32 %s32, 1
        %s477 = sand.u32 %s45, 1
        %s478 = scalar_lea.sflag [#allocation4], %s477
        %s479 = sand.u32 %s45, 1
        %s480 = smul.addr %s479, 2
        %s481 = scalar_lea.vmem [#allocation3], %s480
        // Predicated region
        $region65: #{tpu_custom_call.1} parent=63 // pred_check
          %p482 = pneg %p58
        $region66: #{tpu_custom_call.1} parent=63 // pred_check_branch
          %484 = sbr.rel (%p482) target = $region68
        $region67: #{tpu_custom_call.1} parent=63 // pred_region
          %486 = dma.done %s478, 32
        $region68: #{tpu_custom_call.1} parent=63 // pred_fallthru
          _
        // Predicated region
        $region69: #{tpu_custom_call.1} parent=63 // pred_check
          %p487 = pneg %p79
        $region70: #{tpu_custom_call.1} parent=63 // pred_check_branch
          %489 = sbr.rel (%p487) target = $region72
        $region71: #{tpu_custom_call.1} parent=63 // pred_region
          %491 = dma.done [#allocation7], 128
        $region72: #{tpu_custom_call.1} parent=63 // pred_fallthru
          _
        // Predicated region
        $region73: #{tpu_custom_call.1} parent=63 // pred_check
          %p492 = pneg %p100
        $region74: #{tpu_custom_call.1} parent=63 // pred_check_branch
          %494 = sbr.rel (%p492) target = $region76
        $region75: #{tpu_custom_call.1} parent=63 // pred_region
          %496 = dma.done [#allocation7], 6144
        $region76: #{tpu_custom_call.1} parent=63 // pred_fallthru
          _
        // Predicated region
        $region77: #{tpu_custom_call.1} parent=63 // pred_check
          %p497 = pneg %p121
        $region78: #{tpu_custom_call.1} parent=63 // pred_check_branch
          %499 = sbr.rel (%p497) target = $region80
        $region79: #{tpu_custom_call.1} parent=63 // pred_region
          %501 = dma.done [#allocation10], 48
        $region80: #{tpu_custom_call.1} parent=63 // pred_fallthru
          _
        // Predicated region
        $region81: #{tpu_custom_call.1} parent=63 // pred_check
          %p502 = pneg %p142
        $region82: #{tpu_custom_call.1} parent=63 // pred_check_branch
          %504 = sbr.rel (%p502) target = $region84
        $region83: #{tpu_custom_call.1} parent=63 // pred_region
          %506 = dma.done [#allocation10], 3072
        $region84: #{tpu_custom_call.1} parent=63 // pred_fallthru
          _
        // Predicated region
        $region85: #{tpu_custom_call.1} parent=63 // pred_check
          %p507 = pneg %p184
        $region86: #{tpu_custom_call.1} parent=63 // pred_check_branch
          %509 = sbr.rel (%p507) target = $region88
        $region87: #{tpu_custom_call.1} parent=63 // pred_region
          %511 = dma.done [#allocation13], 8192
        $region88: #{tpu_custom_call.1} parent=63 // pred_fallthru
          _
        // Predicated region
        $region89: #{tpu_custom_call.1} parent=63 // pred_check
          %p512 = pneg %p205
        $region90: #{tpu_custom_call.1} parent=63 // pred_check_branch
          %514 = sbr.rel (%p512) target = $region92
        $region91: #{tpu_custom_call.1} parent=63 // pred_region
          %516 = dma.done [#allocation13], 16384
        $region92: #{tpu_custom_call.1} parent=63 // pred_fallthru
          _
        // Predicated region
        $region93: #{tpu_custom_call.1} parent=63 // pred_check
          %p517 = pneg %p226
        $region94: #{tpu_custom_call.1} parent=63 // pred_check_branch
          %519 = sbr.rel (%p517) target = $region96
        $region95: #{tpu_custom_call.1} parent=63 // pred_region
          %521 = dma.done [#allocation16], 128
        $region96: #{tpu_custom_call.1} parent=63 // pred_fallthru
          _
        // Predicated region
        $region97: #{tpu_custom_call.1} parent=63 // pred_check
          %p522 = pneg %p247
        $region98: #{tpu_custom_call.1} parent=63 // pred_check_branch
          %524 = sbr.rel (%p522) target = $region100
        $region99: #{tpu_custom_call.1} parent=63 // pred_region
          %526 = dma.done [#allocation16], 2048
        $region100: #{tpu_custom_call.1} parent=63 // pred_fallthru
          _
        %s527 = sand.u32 %s45, 1
        %s528 = scalar_lea.sflag [#allocation4], %s527
        %s529 = sand.u32 %s45, 1
        %s530 = smul.addr %s529, 2
        %s531 = scalar_lea.vmem [#allocation3], %s530
        %p532 = pneg %p58
        %p533 = pneg %p55
        %p534 = pneg %p79
        %p535 = pneg %p76
        %p536 = pneg %p100
        %p537 = pneg %p97
        %p538 = pneg %p121
        %p539 = pneg %p118
        %p540 = pneg %p142
        %p541 = pneg %p139
        %p542 = pneg %p163
        %p543 = pneg %p160
        %p544 = pneg %p184
        %p545 = pneg %p181
        %p546 = pneg %p205
        %p547 = pneg %p202
        %p548 = pneg %p226
        %p549 = pneg %p223
        %p550 = pneg %p247
        %p551 = pneg %p244
        %p552 = pneg %p268
        %p553 = pneg %p265
        %p554 = pneg %p294
        %p555 = pneg %p291
        %s556 = sand.u32 %s281, 1
        %s557 = scalar_lea.sflag [#allocation5], %s556
        %s558 = sand.u32 %s281, 1
        %s559 = smul.addr %s558, 2
        %s560 = scalar_lea.vmem [#allocation18], %s559
        %p561 = pneg %p320
        %p562 = pneg %p317
        %s563 = sand.u32 %s307, 1
        %s564 = scalar_lea.sflag [#allocation20], %s563
        %s565 = sand.u32 %s307, 1
        %s566 = smul.addr %s565, 8
        %s567 = scalar_lea.vmem [#allocation19], %s566
        %p568 = scmp.eq.s32.totalorder %s37, 0
        // Predicated region
        $region101: #{tpu_custom_call.1} parent=63 // pred_check
          %p569 = pneg %p568
        $region102: #{tpu_custom_call.1} parent=63 // pred_check_branch
          %571 = sbr.rel (%p569) target = $region104
        $region103: #{tpu_custom_call.1} parent=63 // pred_region
          %v572 = vld [vmem:[#allocation6] sm:$0xff]
          %573 = vst [vmem:[#allocation2] sm:$0xff] %v572
        $region104: #{tpu_custom_call.1} parent=63 // pred_fallthru
          _
        %v574 = vld [vmem:[%s481] sm:$0x3]
        %v575 = vld [vmem:[#allocation2] sm:$0xf]
        %v576 = vld [vmem:[#allocation2 + $0x4] sm:$0xf]
        %v577 = vld [vmem:[#allocation8] sm:$0xff]
        %v578 = vld [vmem:[#allocation8 + $0x8] sm:$0xf]
        %v579 = vld [vmem:[#allocation8 + $0xc] sm:$0xff]
        %v580 = vld [vmem:[#allocation8 + $0x14] sm:$0xf]
        %v581 = vld [vmem:[#allocation8 + $0x18] sm:$0xff]
        %v582 = vld [vmem:[#allocation8 + $0x20] sm:$0xf]
        %v583 = vld [vmem:[#allocation8 + $0x24] sm:$0xff]
        %v584 = vld [vmem:[#allocation8 + $0x2c] sm:$0xf]
        %v585 = vld [vmem:[#allocation8 + $0x30] sm:$0xff]
        %v586 = vld [vmem:[#allocation8 + $0x38] sm:$0xf]
        %v587 = vld [vmem:[#allocation8 + $0x3c] sm:$0xff]
        %v588 = vld [vmem:[#allocation8 + $0x44] sm:$0xf]
        %v589 = vld [vmem:[#allocation8 + $0x48] sm:$0xff]
        %v590 = vld [vmem:[#allocation8 + $0x50] sm:$0xf]
        %v591 = vld [vmem:[#allocation8 + $0x54] sm:$0xff]
        %v592 = vld [vmem:[#allocation8 + $0x5c] sm:$0xf]
        %v593 = vld [vmem:[#allocation8 + $0x60] sm:$0xff]
        %v594 = vld [vmem:[#allocation8 + $0x68] sm:$0xf]
        %v595 = vld [vmem:[#allocation8 + $0x6c] sm:$0xff]
        %v596 = vld [vmem:[#allocation8 + $0x74] sm:$0xf]
        %v597 = vld [vmem:[#allocation8 + $0x78] sm:$0xff]
        %v598 = vld [vmem:[#allocation8 + $0x80] sm:$0xf]
        %v599 = vld [vmem:[#allocation8 + $0x84] sm:$0xff]
        %v600 = vld [vmem:[#allocation8 + $0x8c] sm:$0xf]
        %v601 = vld [vmem:[#allocation8 + $0x90] sm:$0xff]
        %v602 = vld [vmem:[#allocation8 + $0x98] sm:$0xf]
        %v603 = vld [vmem:[#allocation8 + $0x9c] sm:$0xff]
        %v604 = vld [vmem:[#allocation8 + $0xa4] sm:$0xf]
        %v605 = vld [vmem:[#allocation8 + $0xa8] sm:$0xff]
        %v606 = vld [vmem:[#allocation8 + $0xb0] sm:$0xf]
        %v607 = vld [vmem:[#allocation8 + $0xb4] sm:$0xff]
        %v608 = vld [vmem:[#allocation8 + $0xbc] sm:$0xf]
        %v609 = vld [vmem:[#allocation8 + $0xc0] sm:$0xff]
        %v610 = vld [vmem:[#allocation8 + $0xc8] sm:$0xf]
        %v611 = vld [vmem:[#allocation8 + $0xcc] sm:$0xff]
        %v612 = vld [vmem:[#allocation8 + $0xd4] sm:$0xf]
        %v613 = vld [vmem:[#allocation8 + $0xd8] sm:$0xff]
        %v614 = vld [vmem:[#allocation8 + $0xe0] sm:$0xf]
        %v615 = vld [vmem:[#allocation8 + $0xe4] sm:$0xff]
        %v616 = vld [vmem:[#allocation8 + $0xec] sm:$0xf]
        %v617 = vld [vmem:[#allocation8 + $0xf0] sm:$0xff]
        %v618 = vld [vmem:[#allocation8 + $0xf8] sm:$0xf]
        %v619 = vld [vmem:[#allocation8 + $0xfc] sm:$0xff]
        %v620 = vld [vmem:[#allocation8 + $0x104] sm:$0xf]
        %v621 = vld [vmem:[#allocation8 + $0x108] sm:$0xff]
        %v622 = vld [vmem:[#allocation8 + $0x110] sm:$0xf]
        %v623 = vld [vmem:[#allocation8 + $0x114] sm:$0xff]
        %v624 = vld [vmem:[#allocation8 + $0x11c] sm:$0xf]
        %v625 = vld [vmem:[#allocation8 + $0x120] sm:$0xff]
        %v626 = vld [vmem:[#allocation8 + $0x128] sm:$0xf]
        %v627 = vld [vmem:[#allocation8 + $0x12c] sm:$0xff]
        %v628 = vld [vmem:[#allocation8 + $0x134] sm:$0xf]
        %v629 = vld [vmem:[#allocation8 + $0x138] sm:$0xff]
        %v630 = vld [vmem:[#allocation8 + $0x140] sm:$0xf]
        %v631 = vld [vmem:[#allocation8 + $0x144] sm:$0xff]
        %v632 = vld [vmem:[#allocation8 + $0x14c] sm:$0xf]
        %v633 = vld [vmem:[#allocation8 + $0x150] sm:$0xff]
        %v634 = vld [vmem:[#allocation8 + $0x158] sm:$0xf]
        %v635 = vld [vmem:[#allocation8 + $0x15c] sm:$0xff]
        %v636 = vld [vmem:[#allocation8 + $0x164] sm:$0xf]
        %v637 = vld [vmem:[#allocation8 + $0x168] sm:$0xff]
        %v638 = vld [vmem:[#allocation8 + $0x170] sm:$0xf]
        %v639 = vld [vmem:[#allocation8 + $0x174] sm:$0xff]
        %v640 = vld [vmem:[#allocation8 + $0x17c] sm:$0xf]
        %v641 = vld [vmem:[#allocation9] sm:$0x7]
        %v643 = vperm.slane %v641, 0
        %v644 = vperm.slane %v641, 1
        %v645 = vperm.slane %v641, 2
        %650 = vst [vmem:[#allocation1] ss:$9 sm:$0xff] %v574
        %v651 = vld [vmem:[#allocation1] sm:$0xff]
        %v652 = vld [vmem:[#allocation1 + $0x9] sm:$0xff]
        %v719 = vunpack.c.l.b16 %v577
        %v720 = vunpack.c.h.b16 %v577
        %v721 = vunpack.c.l.b16 %v578
        %v722 = vunpack.c.l.b16 %v579
        %v723 = vunpack.c.h.b16 %v579
        %v724 = vunpack.c.l.b16 %v580
        %v725 = vunpack.c.l.b16 %v581
        %v726 = vunpack.c.h.b16 %v581
        %v727 = vunpack.c.l.b16 %v582
        %v728 = vunpack.c.l.b16 %v583
        %v729 = vunpack.c.h.b16 %v583
        %v730 = vunpack.c.l.b16 %v584
        %v731 = vunpack.c.l.b16 %v585
        %v732 = vunpack.c.h.b16 %v585
        %v733 = vunpack.c.l.b16 %v586
        %v734 = vunpack.c.l.b16 %v587
        %v735 = vunpack.c.h.b16 %v587
        %v736 = vunpack.c.l.b16 %v588
        %v737 = vunpack.c.l.b16 %v589
        %v738 = vunpack.c.h.b16 %v589
        %v739 = vunpack.c.l.b16 %v590
        %v740 = vunpack.c.l.b16 %v591
        %v741 = vunpack.c.h.b16 %v591
        %v742 = vunpack.c.l.b16 %v592
        %v743 = vunpack.c.l.b16 %v593
        %v744 = vunpack.c.h.b16 %v593
        %v745 = vunpack.c.l.b16 %v594
        %v746 = vunpack.c.l.b16 %v595
        %v747 = vunpack.c.h.b16 %v595
        %v748 = vunpack.c.l.b16 %v596
        %v749 = vunpack.c.l.b16 %v597
        %v750 = vunpack.c.h.b16 %v597
        %v751 = vunpack.c.l.b16 %v598
        %v752 = vunpack.c.l.b16 %v599
        %v753 = vunpack.c.h.b16 %v599
        %v754 = vunpack.c.l.b16 %v600
        %v755 = vunpack.c.l.b16 %v601
        %v756 = vunpack.c.h.b16 %v601
        %v757 = vunpack.c.l.b16 %v602
        %v758 = vunpack.c.l.b16 %v603
        %v759 = vunpack.c.h.b16 %v603
        %v760 = vunpack.c.l.b16 %v604
        %v761 = vunpack.c.l.b16 %v605
        %v762 = vunpack.c.h.b16 %v605
        %v763 = vunpack.c.l.b16 %v606
        %v764 = vunpack.c.l.b16 %v607
        %v765 = vunpack.c.h.b16 %v607
        %v766 = vunpack.c.l.b16 %v608
        %v767 = vunpack.c.l.b16 %v609
        %v768 = vunpack.c.h.b16 %v609
        %v769 = vunpack.c.l.b16 %v610
        %v770 = vunpack.c.l.b16 %v611
        %v771 = vunpack.c.h.b16 %v611
        %v772 = vunpack.c.l.b16 %v612
        %v773 = vunpack.c.l.b16 %v613
        %v774 = vunpack.c.h.b16 %v613
        %v775 = vunpack.c.l.b16 %v614
        %v776 = vunpack.c.l.b16 %v615
        %v777 = vunpack.c.h.b16 %v615
        %v778 = vunpack.c.l.b16 %v616
        %v779 = vunpack.c.l.b16 %v617
        %v780 = vunpack.c.h.b16 %v617
        %v781 = vunpack.c.l.b16 %v618
        %v782 = vunpack.c.l.b16 %v619
        %v783 = vunpack.c.h.b16 %v619
        %v784 = vunpack.c.l.b16 %v620
        %v785 = vunpack.c.l.b16 %v621
        %v786 = vunpack.c.h.b16 %v621
        %v787 = vunpack.c.l.b16 %v622
        %v788 = vunpack.c.l.b16 %v623
        %v789 = vunpack.c.h.b16 %v623
        %v790 = vunpack.c.l.b16 %v624
        %v791 = vunpack.c.l.b16 %v625
        %v792 = vunpack.c.h.b16 %v625
        %v793 = vunpack.c.l.b16 %v626
        %v794 = vunpack.c.l.b16 %v627
        %v795 = vunpack.c.h.b16 %v627
        %v796 = vunpack.c.l.b16 %v628
        %v797 = vunpack.c.l.b16 %v629
        %v798 = vunpack.c.h.b16 %v629
        %v799 = vunpack.c.l.b16 %v630
        %v800 = vunpack.c.l.b16 %v631
        %v801 = vunpack.c.h.b16 %v631
        %v802 = vunpack.c.l.b16 %v632
        %v803 = vunpack.c.l.b16 %v633
        %v804 = vunpack.c.h.b16 %v633
        %v805 = vunpack.c.l.b16 %v634
        %v806 = vunpack.c.l.b16 %v635
        %v807 = vunpack.c.h.b16 %v635
        %v808 = vunpack.c.l.b16 %v636
        %v809 = vunpack.c.l.b16 %v637
        %v810 = vunpack.c.h.b16 %v637
        %v811 = vunpack.c.l.b16 %v638
        %v812 = vunpack.c.l.b16 %v639
        %v813 = vunpack.c.h.b16 %v639
        %v814 = vunpack.c.l.b16 %v640
        %v815 = vpack.c.b16 %v722, %v719
        %v816 = vpack.c.b16 %v723, %v720
        %v817 = vpack.c.b16 %v724, %v721
        %v818 = vpack.c.b16 %v728, %v725
        %v819 = vpack.c.b16 %v729, %v726
        %v820 = vpack.c.b16 %v730, %v727
        %v821 = vpack.c.b16 %v734, %v731
        %v822 = vpack.c.b16 %v735, %v732
        %v823 = vpack.c.b16 %v736, %v733
        %v824 = vpack.c.b16 %v740, %v737
        %v825 = vpack.c.b16 %v741, %v738
        %v826 = vpack.c.b16 %v742, %v739
        %v827 = vpack.c.b16 %v746, %v743
        %v828 = vpack.c.b16 %v747, %v744
        %v829 = vpack.c.b16 %v748, %v745
        %v830 = vpack.c.b16 %v752, %v749
        %v831 = vpack.c.b16 %v753, %v750
        %v832 = vpack.c.b16 %v754, %v751
        %v833 = vpack.c.b16 %v758, %v755
        %v834 = vpack.c.b16 %v759, %v756
        %v835 = vpack.c.b16 %v760, %v757
        %v836 = vpack.c.b16 %v764, %v761
        %v837 = vpack.c.b16 %v765, %v762
        %v838 = vpack.c.b16 %v766, %v763
        %v839 = vpack.c.b16 %v770, %v767
        %v840 = vpack.c.b16 %v771, %v768
        %v841 = vpack.c.b16 %v772, %v769
        %v842 = vpack.c.b16 %v776, %v773
        %v843 = vpack.c.b16 %v777, %v774
        %v844 = vpack.c.b16 %v778, %v775
        %v845 = vpack.c.b16 %v782, %v779
        %v846 = vpack.c.b16 %v783, %v780
        %v847 = vpack.c.b16 %v784, %v781
        %v848 = vpack.c.b16 %v788, %v785
        %v849 = vpack.c.b16 %v789, %v786
        %v850 = vpack.c.b16 %v790, %v787
        %v851 = vpack.c.b16 %v794, %v791
        %v852 = vpack.c.b16 %v795, %v792
        %v853 = vpack.c.b16 %v796, %v793
        %v854 = vpack.c.b16 %v800, %v797
        %v855 = vpack.c.b16 %v801, %v798
        %v856 = vpack.c.b16 %v802, %v799
        %v857 = vpack.c.b16 %v806, %v803
        %v858 = vpack.c.b16 %v807, %v804
        %v859 = vpack.c.b16 %v808, %v805
        %v860 = vpack.c.b16 %v812, %v809
        %v861 = vpack.c.b16 %v813, %v810
        %v862 = vpack.c.b16 %v814, %v811
        %911 = vmatpush.bf16.msra.mxu0 %v836
        %912 = vmatpush.bf16.msra.mxu0 %v833
        %913 = vmatpush.bf16.msra.mxu0 %v830
        %914 = vmatpush.bf16.msra.mxu0 %v827
        %915 = vmatpush.bf16.msra.mxu0 %v824
        %916 = vmatpush.bf16.msra.mxu0 %v821
        %917 = vmatpush.bf16.msra.mxu0 %v818
        %918 = vmatpush.bf16.msra.mxu0 %v815
        %919 = vmatmul.bf16.gmra.mxu0 %v651
        %v920 = vpop.f32.mrf.mxu0
        %v921 = vadd.f32 %v643, %v920
        %v922 = vpop.f32.mrf.mxu0
        %923 = vdwg.mxu0
        %924 = vmatpush.bf16.msra.mxu0 %v860
        %925 = vmatpush.bf16.msra.mxu0 %v857
        %926 = vmatpush.bf16.msra.mxu0 %v854
        %927 = vmatpush.bf16.msra.mxu0 %v851
        %928 = vmatpush.bf16.msra.mxu0 %v848
        %929 = vmatpush.bf16.msra.mxu0 %v845
        %930 = vmatpush.bf16.msra.mxu0 %v842
        %931 = vmatpush.bf16.msra.mxu0 %v839
        %932 = vmatmul.bf16.gmra.mxu0 %v652
        %v933 = vpop.f32.mrf.mxu0
        %v934 = vadd.f32 %v921, %v933
        %v935 = vpop.f32.mrf.mxu0
        %936 = vdwg.mxu0
        %937 = vmatpush.bf16.msra.mxu0 %v837
        %938 = vmatpush.bf16.msra.mxu0 %v834
        %939 = vmatpush.bf16.msra.mxu0 %v831
        %940 = vmatpush.bf16.msra.mxu0 %v828
        %941 = vmatpush.bf16.msra.mxu0 %v825
        %942 = vmatpush.bf16.msra.mxu0 %v822
        %943 = vmatpush.bf16.msra.mxu0 %v819
        %944 = vmatpush.bf16.msra.mxu0 %v816
        %945 = vmatmul.bf16.gmra.mxu0 %v651
        %v946 = vpop.f32.mrf.mxu0
        %v947 = vadd.f32 %v644, %v946
        %v948 = vpop.f32.mrf.mxu0
        %949 = vdwg.mxu0
        %950 = vmatpush.bf16.msra.mxu0 %v861
        %951 = vmatpush.bf16.msra.mxu0 %v858
        %952 = vmatpush.bf16.msra.mxu0 %v855
        %953 = vmatpush.bf16.msra.mxu0 %v852
        %954 = vmatpush.bf16.msra.mxu0 %v849
        %955 = vmatpush.bf16.msra.mxu0 %v846
        %956 = vmatpush.bf16.msra.mxu0 %v843
        %957 = vmatpush.bf16.msra.mxu0 %v840
        %958 = vmatmul.bf16.gmra.mxu0 %v652
        %v959 = vpop.f32.mrf.mxu0
        %v960 = vadd.f32 %v947, %v959
        %v961 = vpop.f32.mrf.mxu0
        %962 = vdwg.mxu0
        %963 = vmatpush.bf16.msra.mxu0 %v838
        %964 = vmatpush.bf16.msra.mxu0 %v835
        %965 = vmatpush.bf16.msra.mxu0 %v832
        %966 = vmatpush.bf16.msra.mxu0 %v829
        %967 = vmatpush.bf16.msra.mxu0 %v826
        %968 = vmatpush.bf16.msra.mxu0 %v823
        %969 = vmatpush.bf16.msra.mxu0 %v820
        %970 = vmatpush.bf16.msra.mxu0 %v817
        %971 = vmatmul.bf16.gmra.mxu0 %v651
        %v972 = vpop.f32.mrf.mxu0
        %v973 = vadd.f32 %v645, %v972
        %v974 = vpop.f32.mrf.mxu0
        %975 = vdwg.mxu0
        %976 = vmatpush.bf16.msra.mxu0 %v862
        %977 = vmatpush.bf16.msra.mxu0 %v859
        %978 = vmatpush.bf16.msra.mxu0 %v856
        %979 = vmatpush.bf16.msra.mxu0 %v853
        %980 = vmatpush.bf16.msra.mxu0 %v850
        %981 = vmatpush.bf16.msra.mxu0 %v847
        %982 = vmatpush.bf16.msra.mxu0 %v844
        %983 = vmatpush.bf16.msra.mxu0 %v841
        %984 = vmatmul.bf16.gmra.mxu0 %v652
        %v985 = vpop.f32.mrf.mxu0
        %v986 = vadd.f32 %v973, %v985
        %v987 = vpop.f32.mrf.mxu0
        %988 = vdwg.mxu0
        %v989 = vmax.f32 %v934, 0.0
        %v990 = vmax.f32 %v960, 0.0
        %v991 = vmax.f32 %v986, 0.0
        %v992 = vpack.c.bf16 %v989, %v989
        %v993 = vpack.c.bf16 %v990, %v990
        %v994 = vpack.c.bf16 %v991, %v991
        %v995 = vld [vmem:[#allocation11] sm:$0xf]
        %v996 = vld [vmem:[#allocation11 + $0x4] sm:$0xf]
        %v997 = vld [vmem:[#allocation11 + $0x8] sm:$0xf]
        %v998 = vld [vmem:[#allocation11 + $0xc] sm:$0xf]
        %v999 = vld [vmem:[#allocation11 + $0x10] sm:$0xf]
        %v1000 = vld [vmem:[#allocation11 + $0x14] sm:$0xf]
        %v1001 = vld [vmem:[#allocation11 + $0x18] sm:$0xf]
        %v1002 = vld [vmem:[#allocation11 + $0x1c] sm:$0xf]
        %v1003 = vld [vmem:[#allocation11 + $0x20] sm:$0xf]
        %v1004 = vld [vmem:[#allocation11 + $0x24] sm:$0xf]
        %v1005 = vld [vmem:[#allocation11 + $0x28] sm:$0xf]
        %v1006 = vld [vmem:[#allocation11 + $0x2c] sm:$0xf]
        %v1007 = vld [vmem:[#allocation11 + $0x30] sm:$0xf]
        %v1008 = vld [vmem:[#allocation11 + $0x34] sm:$0xf]
        %v1009 = vld [vmem:[#allocation11 + $0x38] sm:$0xf]
        %v1010 = vld [vmem:[#allocation11 + $0x3c] sm:$0xf]
        %v1011 = vld [vmem:[#allocation11 + $0x40] sm:$0xf]
        %v1012 = vld [vmem:[#allocation11 + $0x44] sm:$0xf]
        %v1013 = vld [vmem:[#allocation11 + $0x48] sm:$0xf]
        %v1014 = vld [vmem:[#allocation11 + $0x4c] sm:$0xf]
        %v1015 = vld [vmem:[#allocation11 + $0x50] sm:$0xf]
        %v1016 = vld [vmem:[#allocation11 + $0x54] sm:$0xf]
        %v1017 = vld [vmem:[#allocation11 + $0x58] sm:$0xf]
        %v1018 = vld [vmem:[#allocation11 + $0x5c] sm:$0xf]
        %v1019 = vld [vmem:[#allocation11 + $0x60] sm:$0xf]
        %v1020 = vld [vmem:[#allocation11 + $0x64] sm:$0xf]
        %v1021 = vld [vmem:[#allocation11 + $0x68] sm:$0xf]
        %v1022 = vld [vmem:[#allocation11 + $0x6c] sm:$0xf]
        %v1023 = vld [vmem:[#allocation11 + $0x70] sm:$0xf]
        %v1024 = vld [vmem:[#allocation11 + $0x74] sm:$0xf]
        %v1025 = vld [vmem:[#allocation11 + $0x78] sm:$0xf]
        %v1026 = vld [vmem:[#allocation11 + $0x7c] sm:$0xf]
        %v1027 = vld [vmem:[#allocation11 + $0x80] sm:$0xf]
        %v1028 = vld [vmem:[#allocation11 + $0x84] sm:$0xf]
        %v1029 = vld [vmem:[#allocation11 + $0x88] sm:$0xf]
        %v1030 = vld [vmem:[#allocation11 + $0x8c] sm:$0xf]
        %v1031 = vld [vmem:[#allocation11 + $0x90] sm:$0xf]
        %v1032 = vld [vmem:[#allocation11 + $0x94] sm:$0xf]
        %v1033 = vld [vmem:[#allocation11 + $0x98] sm:$0xf]
        %v1034 = vld [vmem:[#allocation11 + $0x9c] sm:$0xf]
        %v1035 = vld [vmem:[#allocation11 + $0xa0] sm:$0xf]
        %v1036 = vld [vmem:[#allocation11 + $0xa4] sm:$0xf]
        %v1037 = vld [vmem:[#allocation11 + $0xa8] sm:$0xf]
        %v1038 = vld [vmem:[#allocation11 + $0xac] sm:$0xf]
        %v1039 = vld [vmem:[#allocation11 + $0xb0] sm:$0xf]
        %v1040 = vld [vmem:[#allocation11 + $0xb4] sm:$0xf]
        %v1041 = vld [vmem:[#allocation11 + $0xb8] sm:$0xf]
        %v1042 = vld [vmem:[#allocation11 + $0xbc] sm:$0xf]
        %v1043 = vld [vmem:[%s5] sm:$0x1]
        %v1045 = vperm.slane %v1043, 0
        %v1095 = vunpack.c.l.b16 %v995
        %v1096 = vunpack.c.l.b16 %v996
        %v1097 = vunpack.c.l.b16 %v997
        %v1098 = vunpack.c.l.b16 %v998
        %v1099 = vunpack.c.l.b16 %v999
        %v1100 = vunpack.c.l.b16 %v1000
        %v1101 = vunpack.c.l.b16 %v1001
        %v1102 = vunpack.c.l.b16 %v1002
        %v1103 = vunpack.c.l.b16 %v1003
        %v1104 = vunpack.c.l.b16 %v1004
        %v1105 = vunpack.c.l.b16 %v1005
        %v1106 = vunpack.c.l.b16 %v1006
        %v1107 = vunpack.c.l.b16 %v1007
        %v1108 = vunpack.c.l.b16 %v1008
        %v1109 = vunpack.c.l.b16 %v1009
        %v1110 = vunpack.c.l.b16 %v1010
        %v1111 = vunpack.c.l.b16 %v1011
        %v1112 = vunpack.c.l.b16 %v1012
        %v1113 = vunpack.c.l.b16 %v1013
        %v1114 = vunpack.c.l.b16 %v1014
        %v1115 = vunpack.c.l.b16 %v1015
        %v1116 = vunpack.c.l.b16 %v1016
        %v1117 = vunpack.c.l.b16 %v1017
        %v1118 = vunpack.c.l.b16 %v1018
        %v1119 = vunpack.c.l.b16 %v1019
        %v1120 = vunpack.c.l.b16 %v1020
        %v1121 = vunpack.c.l.b16 %v1021
        %v1122 = vunpack.c.l.b16 %v1022
        %v1123 = vunpack.c.l.b16 %v1023
        %v1124 = vunpack.c.l.b16 %v1024
        %v1125 = vunpack.c.l.b16 %v1025
        %v1126 = vunpack.c.l.b16 %v1026
        %v1127 = vunpack.c.l.b16 %v1027
        %v1128 = vunpack.c.l.b16 %v1028
        %v1129 = vunpack.c.l.b16 %v1029
        %v1130 = vunpack.c.l.b16 %v1030
        %v1131 = vunpack.c.l.b16 %v1031
        %v1132 = vunpack.c.l.b16 %v1032
        %v1133 = vunpack.c.l.b16 %v1033
        %v1134 = vunpack.c.l.b16 %v1034
        %v1135 = vunpack.c.l.b16 %v1035
        %v1136 = vunpack.c.l.b16 %v1036
        %v1137 = vunpack.c.l.b16 %v1037
        %v1138 = vunpack.c.l.b16 %v1038
        %v1139 = vunpack.c.l.b16 %v1039
        %v1140 = vunpack.c.l.b16 %v1040
        %v1141 = vunpack.c.l.b16 %v1041
        %v1142 = vunpack.c.l.b16 %v1042
        %v1143 = vpack.c.b16 %v1096, %v1095
        %v1144 = vpack.c.b16 %v1098, %v1097
        %v1145 = vpack.c.b16 %v1100, %v1099
        %v1146 = vpack.c.b16 %v1102, %v1101
        %v1147 = vpack.c.b16 %v1104, %v1103
        %v1148 = vpack.c.b16 %v1106, %v1105
        %v1149 = vpack.c.b16 %v1108, %v1107
        %v1150 = vpack.c.b16 %v1110, %v1109
        %v1151 = vpack.c.b16 %v1112, %v1111
        %v1152 = vpack.c.b16 %v1114, %v1113
        %v1153 = vpack.c.b16 %v1116, %v1115
        %v1154 = vpack.c.b16 %v1118, %v1117
        %v1155 = vpack.c.b16 %v1120, %v1119
        %v1156 = vpack.c.b16 %v1122, %v1121
        %v1157 = vpack.c.b16 %v1124, %v1123
        %v1158 = vpack.c.b16 %v1126, %v1125
        %v1159 = vpack.c.b16 %v1128, %v1127
        %v1160 = vpack.c.b16 %v1130, %v1129
        %v1161 = vpack.c.b16 %v1132, %v1131
        %v1162 = vpack.c.b16 %v1134, %v1133
        %v1163 = vpack.c.b16 %v1136, %v1135
        %v1164 = vpack.c.b16 %v1138, %v1137
        %v1165 = vpack.c.b16 %v1140, %v1139
        %v1166 = vpack.c.b16 %v1142, %v1141
        %1191 = vmatpush.bf16.msra.mxu0 %v1150
        %1192 = vmatpush.bf16.msra.mxu0 %v1149
        %1193 = vmatpush.bf16.msra.mxu0 %v1148
        %1194 = vmatpush.bf16.msra.mxu0 %v1147
        %1195 = vmatpush.bf16.msra.mxu0 %v1146
        %1196 = vmatpush.bf16.msra.mxu0 %v1145
        %1197 = vmatpush.bf16.msra.mxu0 %v1144
        %1198 = vmatpush.bf16.msra.mxu0 %v1143
        %1199 = vmatmul.bf16.gmra.mxu0 %v992
        %v1200 = vpop.f32.mrf.mxu0
        %v1201 = vadd.f32 %v1045, %v1200
        %v1202 = vpop.f32.mrf.mxu0
        %1203 = vdwg.mxu0
        %1204 = vmatpush.bf16.msra.mxu0 %v1158
        %1205 = vmatpush.bf16.msra.mxu0 %v1157
        %1206 = vmatpush.bf16.msra.mxu0 %v1156
        %1207 = vmatpush.bf16.msra.mxu0 %v1155
        %1208 = vmatpush.bf16.msra.mxu0 %v1154
        %1209 = vmatpush.bf16.msra.mxu0 %v1153
        %1210 = vmatpush.bf16.msra.mxu0 %v1152
        %1211 = vmatpush.bf16.msra.mxu0 %v1151
        %1212 = vmatmul.bf16.gmra.mxu0 %v993
        %v1213 = vpop.f32.mrf.mxu0
        %v1214 = vadd.f32 %v1201, %v1213
        %v1215 = vpop.f32.mrf.mxu0
        %1216 = vdwg.mxu0
        %1217 = vmatpush.bf16.msra.mxu0 %v1166
        %1218 = vmatpush.bf16.msra.mxu0 %v1165
        %1219 = vmatpush.bf16.msra.mxu0 %v1164
        %1220 = vmatpush.bf16.msra.mxu0 %v1163
        %1221 = vmatpush.bf16.msra.mxu0 %v1162
        %1222 = vmatpush.bf16.msra.mxu0 %v1161
        %1223 = vmatpush.bf16.msra.mxu0 %v1160
        %1224 = vmatpush.bf16.msra.mxu0 %v1159
        %1225 = vmatmul.bf16.gmra.mxu0 %v994
        %v1226 = vpop.f32.mrf.mxu0
        %v1227 = vadd.f32 %v1214, %v1226
        %v1228 = vpop.f32.mrf.mxu0
        %1229 = vdwg.mxu0
        %v1230 = vmax.f32 %v1227, 0.0
        %v1231 = vpack.c.bf16 %v1230, %v1230
        %v1232 = vld [vmem:[#allocation12] sm:$0xff]
        %v1233 = vld [vmem:[#allocation12 + $0x8] sm:$0xff]
        %v1234 = vld [vmem:[#allocation12 + $0x10] sm:$0xff]
        %v1235 = vld [vmem:[#allocation12 + $0x18] sm:$0xff]
        %v1236 = vld [vmem:[#allocation12 + $0x20] sm:$0xff]
        %v1237 = vld [vmem:[#allocation12 + $0x28] sm:$0xff]
        %v1238 = vld [vmem:[#allocation12 + $0x30] sm:$0xff]
        %v1239 = vld [vmem:[#allocation12 + $0x38] sm:$0xff]
        %v1240 = vld [vmem:[#allocation12 + $0x40] sm:$0xff]
        %v1241 = vld [vmem:[#allocation12 + $0x48] sm:$0xff]
        %v1242 = vld [vmem:[#allocation12 + $0x50] sm:$0xff]
        %v1243 = vld [vmem:[#allocation12 + $0x58] sm:$0xff]
        %v1244 = vld [vmem:[#allocation12 + $0x60] sm:$0xff]
        %v1245 = vld [vmem:[#allocation12 + $0x68] sm:$0xff]
        %v1246 = vld [vmem:[#allocation12 + $0x70] sm:$0xff]
        %v1247 = vld [vmem:[#allocation12 + $0x78] sm:$0xff]
        %v1248 = vld [vmem:[#allocation12 + $0x80] sm:$0xff]
        %v1249 = vld [vmem:[#allocation12 + $0x88] sm:$0xff]
        %v1250 = vld [vmem:[#allocation12 + $0x90] sm:$0xff]
        %v1251 = vld [vmem:[#allocation12 + $0x98] sm:$0xff]
        %v1252 = vld [vmem:[#allocation12 + $0xa0] sm:$0xff]
        %v1253 = vld [vmem:[#allocation12 + $0xa8] sm:$0xff]
        %v1254 = vld [vmem:[#allocation12 + $0xb0] sm:$0xff]
        %v1255 = vld [vmem:[#allocation12 + $0xb8] sm:$0xff]
        %v1256 = vld [vmem:[#allocation12 + $0xc0] sm:$0xff]
        %v1257 = vld [vmem:[#allocation12 + $0xc8] sm:$0xff]
        %v1258 = vld [vmem:[#allocation12 + $0xd0] sm:$0xff]
        %v1259 = vld [vmem:[#allocation12 + $0xd8] sm:$0xff]
        %v1260 = vld [vmem:[#allocation12 + $0xe0] sm:$0xff]
        %v1261 = vld [vmem:[#allocation12 + $0xe8] sm:$0xff]
        %v1262 = vld [vmem:[#allocation12 + $0xf0] sm:$0xff]
        %v1263 = vld [vmem:[#allocation12 + $0xf8] sm:$0xff]
        %v1264 = vld [vmem:[#allocation12 + $0x100] sm:$0xff]
        %v1265 = vld [vmem:[#allocation12 + $0x108] sm:$0xff]
        %v1266 = vld [vmem:[#allocation12 + $0x110] sm:$0xff]
        %v1267 = vld [vmem:[#allocation12 + $0x118] sm:$0xff]
        %v1268 = vld [vmem:[#allocation12 + $0x120] sm:$0xff]
        %v1269 = vld [vmem:[#allocation12 + $0x128] sm:$0xff]
        %v1270 = vld [vmem:[#allocation12 + $0x130] sm:$0xff]
        %v1271 = vld [vmem:[#allocation12 + $0x138] sm:$0xff]
        %v1272 = vld [vmem:[#allocation12 + $0x140] sm:$0xff]
        %v1273 = vld [vmem:[#allocation12 + $0x148] sm:$0xff]
        %v1274 = vld [vmem:[#allocation12 + $0x150] sm:$0xff]
        %v1275 = vld [vmem:[#allocation12 + $0x158] sm:$0xff]
        %v1276 = vld [vmem:[#allocation12 + $0x160] sm:$0xff]
        %v1277 = vld [vmem:[#allocation12 + $0x168] sm:$0xff]
        %v1278 = vld [vmem:[#allocation12 + $0x170] sm:$0xff]
        %v1279 = vld [vmem:[#allocation12 + $0x178] sm:$0xff]
        %v1280 = vld [vmem:[#allocation12 + $0x180] sm:$0xff]
        %v1281 = vld [vmem:[#allocation12 + $0x188] sm:$0xff]
        %v1282 = vld [vmem:[#allocation12 + $0x190] sm:$0xff]
        %v1283 = vld [vmem:[#allocation12 + $0x198] sm:$0xff]
        %v1284 = vld [vmem:[#allocation12 + $0x1a0] sm:$0xff]
        %v1285 = vld [vmem:[#allocation12 + $0x1a8] sm:$0xff]
        %v1286 = vld [vmem:[#allocation12 + $0x1b0] sm:$0xff]
        %v1287 = vld [vmem:[#allocation12 + $0x1b8] sm:$0xff]
        %v1288 = vld [vmem:[#allocation12 + $0x1c0] sm:$0xff]
        %v1289 = vld [vmem:[#allocation12 + $0x1c8] sm:$0xff]
        %v1290 = vld [vmem:[#allocation12 + $0x1d0] sm:$0xff]
        %v1291 = vld [vmem:[#allocation12 + $0x1d8] sm:$0xff]
        %v1292 = vld [vmem:[#allocation12 + $0x1e0] sm:$0xff]
        %v1293 = vld [vmem:[#allocation12 + $0x1e8] sm:$0xff]
        %v1294 = vld [vmem:[#allocation12 + $0x1f0] sm:$0xff]
        %v1295 = vld [vmem:[#allocation12 + $0x1f8] sm:$0xff]
        %1297 = vst [vmem:[#allocation1] ss:$4 sm:$0xff] %v575
        %v1298 = vld.sshfl [vmem:[#allocation1] sm:$0xff pattern:$0x73625140]
        %v1299 = vld.sshfl [vmem:[#allocation1 + $0x8] sm:$0xff pattern:$0x73625140]
        %v1302 = vpack.c.bf16 %v1298, %v1298
        %v1303 = vpack.c.bf16 %v1299, %v1299
        %v1304 = vld [vmem:[#allocation14] sm:$0xff]
        %v1305 = vld [vmem:[#allocation14 + $0x8] sm:$0xff]
        %v1306 = vld [vmem:[#allocation14 + $0x10] sm:$0xff]
        %v1307 = vld [vmem:[#allocation14 + $0x18] sm:$0xff]
        %v1308 = vld [vmem:[#allocation14 + $0x20] sm:$0xff]
        %v1309 = vld [vmem:[#allocation14 + $0x28] sm:$0xff]
        %v1310 = vld [vmem:[#allocation14 + $0x30] sm:$0xff]
        %v1311 = vld [vmem:[#allocation14 + $0x38] sm:$0xff]
        %v1312 = vld [vmem:[#allocation14 + $0x40] sm:$0xff]
        %v1313 = vld [vmem:[#allocation14 + $0x48] sm:$0xff]
        %v1314 = vld [vmem:[#allocation14 + $0x50] sm:$0xff]
        %v1315 = vld [vmem:[#allocation14 + $0x58] sm:$0xff]
        %v1316 = vld [vmem:[#allocation14 + $0x60] sm:$0xff]
        %v1317 = vld [vmem:[#allocation14 + $0x68] sm:$0xff]
        %v1318 = vld [vmem:[#allocation14 + $0x70] sm:$0xff]
        %v1319 = vld [vmem:[#allocation14 + $0x78] sm:$0xff]
        %v1320 = vld [vmem:[#allocation14 + $0x80] sm:$0xff]
        %v1321 = vld [vmem:[#allocation14 + $0x88] sm:$0xff]
        %v1322 = vld [vmem:[#allocation14 + $0x90] sm:$0xff]
        %v1323 = vld [vmem:[#allocation14 + $0x98] sm:$0xff]
        %v1324 = vld [vmem:[#allocation14 + $0xa0] sm:$0xff]
        %v1325 = vld [vmem:[#allocation14 + $0xa8] sm:$0xff]
        %v1326 = vld [vmem:[#allocation14 + $0xb0] sm:$0xff]
        %v1327 = vld [vmem:[#allocation14 + $0xb8] sm:$0xff]
        %v1328 = vld [vmem:[#allocation14 + $0xc0] sm:$0xff]
        %v1329 = vld [vmem:[#allocation14 + $0xc8] sm:$0xff]
        %v1330 = vld [vmem:[#allocation14 + $0xd0] sm:$0xff]
        %v1331 = vld [vmem:[#allocation14 + $0xd8] sm:$0xff]
        %v1332 = vld [vmem:[#allocation14 + $0xe0] sm:$0xff]
        %v1333 = vld [vmem:[#allocation14 + $0xe8] sm:$0xff]
        %v1334 = vld [vmem:[#allocation14 + $0xf0] sm:$0xff]
        %v1335 = vld [vmem:[#allocation14 + $0xf8] sm:$0xff]
        %v1336 = vld [vmem:[#allocation14 + $0x100] sm:$0xff]
        %v1337 = vld [vmem:[#allocation14 + $0x108] sm:$0xff]
        %v1338 = vld [vmem:[#allocation14 + $0x110] sm:$0xff]
        %v1339 = vld [vmem:[#allocation14 + $0x118] sm:$0xff]
        %v1340 = vld [vmem:[#allocation14 + $0x120] sm:$0xff]
        %v1341 = vld [vmem:[#allocation14 + $0x128] sm:$0xff]
        %v1342 = vld [vmem:[#allocation14 + $0x130] sm:$0xff]
        %v1343 = vld [vmem:[#allocation14 + $0x138] sm:$0xff]
        %v1344 = vld [vmem:[#allocation14 + $0x140] sm:$0xff]
        %v1345 = vld [vmem:[#allocation14 + $0x148] sm:$0xff]
        %v1346 = vld [vmem:[#allocation14 + $0x150] sm:$0xff]
        %v1347 = vld [vmem:[#allocation14 + $0x158] sm:$0xff]
        %v1348 = vld [vmem:[#allocation14 + $0x160] sm:$0xff]
        %v1349 = vld [vmem:[#allocation14 + $0x168] sm:$0xff]
        %v1350 = vld [vmem:[#allocation14 + $0x170] sm:$0xff]
        %v1351 = vld [vmem:[#allocation14 + $0x178] sm:$0xff]
        %v1352 = vld [vmem:[#allocation14 + $0x180] sm:$0xff]
        %v1353 = vld [vmem:[#allocation14 + $0x188] sm:$0xff]
        %v1354 = vld [vmem:[#allocation14 + $0x190] sm:$0xff]
        %v1355 = vld [vmem:[#allocation14 + $0x198] sm:$0xff]
        %v1356 = vld [vmem:[#allocation14 + $0x1a0] sm:$0xff]
        %v1357 = vld [vmem:[#allocation14 + $0x1a8] sm:$0xff]
        %v1358 = vld [vmem:[#allocation14 + $0x1b0] sm:$0xff]
        %v1359 = vld [vmem:[#allocation14 + $0x1b8] sm:$0xff]
        %v1360 = vld [vmem:[#allocation14 + $0x1c0] sm:$0xff]
        %v1361 = vld [vmem:[#allocation14 + $0x1c8] sm:$0xff]
        %v1362 = vld [vmem:[#allocation14 + $0x1d0] sm:$0xff]
        %v1363 = vld [vmem:[#allocation14 + $0x1d8] sm:$0xff]
        %v1364 = vld [vmem:[#allocation14 + $0x1e0] sm:$0xff]
        %v1365 = vld [vmem:[#allocation14 + $0x1e8] sm:$0xff]
        %v1366 = vld [vmem:[#allocation14 + $0x1f0] sm:$0xff]
        %v1367 = vld [vmem:[#allocation14 + $0x1f8] sm:$0xff]
        %v1368 = vld [vmem:[#allocation14 + $0x200] sm:$0xff]
        %v1369 = vld [vmem:[#allocation14 + $0x208] sm:$0xff]
        %v1370 = vld [vmem:[#allocation14 + $0x210] sm:$0xff]
        %v1371 = vld [vmem:[#allocation14 + $0x218] sm:$0xff]
        %v1372 = vld [vmem:[#allocation14 + $0x220] sm:$0xff]
        %v1373 = vld [vmem:[#allocation14 + $0x228] sm:$0xff]
        %v1374 = vld [vmem:[#allocation14 + $0x230] sm:$0xff]
        %v1375 = vld [vmem:[#allocation14 + $0x238] sm:$0xff]
        %v1376 = vld [vmem:[#allocation14 + $0x240] sm:$0xff]
        %v1377 = vld [vmem:[#allocation14 + $0x248] sm:$0xff]
        %v1378 = vld [vmem:[#allocation14 + $0x250] sm:$0xff]
        %v1379 = vld [vmem:[#allocation14 + $0x258] sm:$0xff]
        %v1380 = vld [vmem:[#allocation14 + $0x260] sm:$0xff]
        %v1381 = vld [vmem:[#allocation14 + $0x268] sm:$0xff]
        %v1382 = vld [vmem:[#allocation14 + $0x270] sm:$0xff]
        %v1383 = vld [vmem:[#allocation14 + $0x278] sm:$0xff]
        %v1384 = vld [vmem:[#allocation14 + $0x280] sm:$0xff]
        %v1385 = vld [vmem:[#allocation14 + $0x288] sm:$0xff]
        %v1386 = vld [vmem:[#allocation14 + $0x290] sm:$0xff]
        %v1387 = vld [vmem:[#allocation14 + $0x298] sm:$0xff]
        %v1388 = vld [vmem:[#allocation14 + $0x2a0] sm:$0xff]
        %v1389 = vld [vmem:[#allocation14 + $0x2a8] sm:$0xff]
        %v1390 = vld [vmem:[#allocation14 + $0x2b0] sm:$0xff]
        %v1391 = vld [vmem:[#allocation14 + $0x2b8] sm:$0xff]
        %v1392 = vld [vmem:[#allocation14 + $0x2c0] sm:$0xff]
        %v1393 = vld [vmem:[#allocation14 + $0x2c8] sm:$0xff]
        %v1394 = vld [vmem:[#allocation14 + $0x2d0] sm:$0xff]
        %v1395 = vld [vmem:[#allocation14 + $0x2d8] sm:$0xff]
        %v1396 = vld [vmem:[#allocation14 + $0x2e0] sm:$0xff]
        %v1397 = vld [vmem:[#allocation14 + $0x2e8] sm:$0xff]
        %v1398 = vld [vmem:[#allocation14 + $0x2f0] sm:$0xff]
        %v1399 = vld [vmem:[#allocation14 + $0x2f8] sm:$0xff]
        %v1400 = vld [vmem:[#allocation14 + $0x300] sm:$0xff]
        %v1401 = vld [vmem:[#allocation14 + $0x308] sm:$0xff]
        %v1402 = vld [vmem:[#allocation14 + $0x310] sm:$0xff]
        %v1403 = vld [vmem:[#allocation14 + $0x318] sm:$0xff]
        %v1404 = vld [vmem:[#allocation14 + $0x320] sm:$0xff]
        %v1405 = vld [vmem:[#allocation14 + $0x328] sm:$0xff]
        %v1406 = vld [vmem:[#allocation14 + $0x330] sm:$0xff]
        %v1407 = vld [vmem:[#allocation14 + $0x338] sm:$0xff]
        %v1408 = vld [vmem:[#allocation14 + $0x340] sm:$0xff]
        %v1409 = vld [vmem:[#allocation14 + $0x348] sm:$0xff]
        %v1410 = vld [vmem:[#allocation14 + $0x350] sm:$0xff]
        %v1411 = vld [vmem:[#allocation14 + $0x358] sm:$0xff]
        %v1412 = vld [vmem:[#allocation14 + $0x360] sm:$0xff]
        %v1413 = vld [vmem:[#allocation14 + $0x368] sm:$0xff]
        %v1414 = vld [vmem:[#allocation14 + $0x370] sm:$0xff]
        %v1415 = vld [vmem:[#allocation14 + $0x378] sm:$0xff]
        %v1416 = vld [vmem:[#allocation14 + $0x380] sm:$0xff]
        %v1417 = vld [vmem:[#allocation14 + $0x388] sm:$0xff]
        %v1418 = vld [vmem:[#allocation14 + $0x390] sm:$0xff]
        %v1419 = vld [vmem:[#allocation14 + $0x398] sm:$0xff]
        %v1420 = vld [vmem:[#allocation14 + $0x3a0] sm:$0xff]
        %v1421 = vld [vmem:[#allocation14 + $0x3a8] sm:$0xff]
        %v1422 = vld [vmem:[#allocation14 + $0x3b0] sm:$0xff]
        %v1423 = vld [vmem:[#allocation14 + $0x3b8] sm:$0xff]
        %v1424 = vld [vmem:[#allocation14 + $0x3c0] sm:$0xff]
        %v1425 = vld [vmem:[#allocation14 + $0x3c8] sm:$0xff]
        %v1426 = vld [vmem:[#allocation14 + $0x3d0] sm:$0xff]
        %v1427 = vld [vmem:[#allocation14 + $0x3d8] sm:$0xff]
        %v1428 = vld [vmem:[#allocation14 + $0x3e0] sm:$0xff]
        %v1429 = vld [vmem:[#allocation14 + $0x3e8] sm:$0xff]
        %v1430 = vld [vmem:[#allocation14 + $0x3f0] sm:$0xff]
        %v1431 = vld [vmem:[#allocation14 + $0x3f8] sm:$0xff]
        %v1560 = vunpack.c.l.b16 %v1304
        %v1561 = vunpack.c.h.b16 %v1304
        %v1562 = vunpack.c.l.b16 %v1305
        %v1563 = vunpack.c.h.b16 %v1305
        %v1564 = vunpack.c.l.b16 %v1306
        %v1565 = vunpack.c.h.b16 %v1306
        %v1566 = vunpack.c.l.b16 %v1307
        %v1567 = vunpack.c.h.b16 %v1307
        %v1568 = vunpack.c.l.b16 %v1308
        %v1569 = vunpack.c.h.b16 %v1308
        %v1570 = vunpack.c.l.b16 %v1309
        %v1571 = vunpack.c.h.b16 %v1309
        %v1572 = vunpack.c.l.b16 %v1310
        %v1573 = vunpack.c.h.b16 %v1310
        %v1574 = vunpack.c.l.b16 %v1311
        %v1575 = vunpack.c.h.b16 %v1311
        %v1576 = vunpack.c.l.b16 %v1312
        %v1577 = vunpack.c.h.b16 %v1312
        %v1578 = vunpack.c.l.b16 %v1313
        %v1579 = vunpack.c.h.b16 %v1313
        %v1580 = vunpack.c.l.b16 %v1314
        %v1581 = vunpack.c.h.b16 %v1314
        %v1582 = vunpack.c.l.b16 %v1315
        %v1583 = vunpack.c.h.b16 %v1315
        %v1584 = vunpack.c.l.b16 %v1316
        %v1585 = vunpack.c.h.b16 %v1316
        %v1586 = vunpack.c.l.b16 %v1317
        %v1587 = vunpack.c.h.b16 %v1317
        %v1588 = vunpack.c.l.b16 %v1318
        %v1589 = vunpack.c.h.b16 %v1318
        %v1590 = vunpack.c.l.b16 %v1319
        %v1591 = vunpack.c.h.b16 %v1319
        %v1592 = vunpack.c.l.b16 %v1320
        %v1593 = vunpack.c.h.b16 %v1320
        %v1594 = vunpack.c.l.b16 %v1321
        %v1595 = vunpack.c.h.b16 %v1321
        %v1596 = vunpack.c.l.b16 %v1322
        %v1597 = vunpack.c.h.b16 %v1322
        %v1598 = vunpack.c.l.b16 %v1323
        %v1599 = vunpack.c.h.b16 %v1323
        %v1600 = vunpack.c.l.b16 %v1324
        %v1601 = vunpack.c.h.b16 %v1324
        %v1602 = vunpack.c.l.b16 %v1325
        %v1603 = vunpack.c.h.b16 %v1325
        %v1604 = vunpack.c.l.b16 %v1326
        %v1605 = vunpack.c.h.b16 %v1326
        %v1606 = vunpack.c.l.b16 %v1327
        %v1607 = vunpack.c.h.b16 %v1327
        %v1608 = vunpack.c.l.b16 %v1328
        %v1609 = vunpack.c.h.b16 %v1328
        %v1610 = vunpack.c.l.b16 %v1329
        %v1611 = vunpack.c.h.b16 %v1329
        %v1612 = vunpack.c.l.b16 %v1330
        %v1613 = vunpack.c.h.b16 %v1330
        %v1614 = vunpack.c.l.b16 %v1331
        %v1615 = vunpack.c.h.b16 %v1331
        %v1616 = vunpack.c.l.b16 %v1332
        %v1617 = vunpack.c.h.b16 %v1332
        %v1618 = vunpack.c.l.b16 %v1333
        %v1619 = vunpack.c.h.b16 %v1333
        %v1620 = vunpack.c.l.b16 %v1334
        %v1621 = vunpack.c.h.b16 %v1334
        %v1622 = vunpack.c.l.b16 %v1335
        %v1623 = vunpack.c.h.b16 %v1335
        %v1624 = vunpack.c.l.b16 %v1336
        %v1625 = vunpack.c.h.b16 %v1336
        %v1626 = vunpack.c.l.b16 %v1337
        %v1627 = vunpack.c.h.b16 %v1337
        %v1628 = vunpack.c.l.b16 %v1338
        %v1629 = vunpack.c.h.b16 %v1338
        %v1630 = vunpack.c.l.b16 %v1339
        %v1631 = vunpack.c.h.b16 %v1339
        %v1632 = vunpack.c.l.b16 %v1340
        %v1633 = vunpack.c.h.b16 %v1340
        %v1634 = vunpack.c.l.b16 %v1341
        %v1635 = vunpack.c.h.b16 %v1341
        %v1636 = vunpack.c.l.b16 %v1342
        %v1637 = vunpack.c.h.b16 %v1342
        %v1638 = vunpack.c.l.b16 %v1343
        %v1639 = vunpack.c.h.b16 %v1343
        %v1640 = vunpack.c.l.b16 %v1344
        %v1641 = vunpack.c.h.b16 %v1344
        %v1642 = vunpack.c.l.b16 %v1345
        %v1643 = vunpack.c.h.b16 %v1345
        %v1644 = vunpack.c.l.b16 %v1346
        %v1645 = vunpack.c.h.b16 %v1346
        %v1646 = vunpack.c.l.b16 %v1347
        %v1647 = vunpack.c.h.b16 %v1347
        %v1648 = vunpack.c.l.b16 %v1348
        %v1649 = vunpack.c.h.b16 %v1348
        %v1650 = vunpack.c.l.b16 %v1349
        %v1651 = vunpack.c.h.b16 %v1349
        %v1652 = vunpack.c.l.b16 %v1350
        %v1653 = vunpack.c.h.b16 %v1350
        %v1654 = vunpack.c.l.b16 %v1351
        %v1655 = vunpack.c.h.b16 %v1351
        %v1656 = vunpack.c.l.b16 %v1352
        %v1657 = vunpack.c.h.b16 %v1352
        %v1658 = vunpack.c.l.b16 %v1353
        %v1659 = vunpack.c.h.b16 %v1353
        %v1660 = vunpack.c.l.b16 %v1354
        %v1661 = vunpack.c.h.b16 %v1354
        %v1662 = vunpack.c.l.b16 %v1355
        %v1663 = vunpack.c.h.b16 %v1355
        %v1664 = vunpack.c.l.b16 %v1356
        %v1665 = vunpack.c.h.b16 %v1356
        %v1666 = vunpack.c.l.b16 %v1357
        %v1667 = vunpack.c.h.b16 %v1357
        %v1668 = vunpack.c.l.b16 %v1358
        %v1669 = vunpack.c.h.b16 %v1358
        %v1670 = vunpack.c.l.b16 %v1359
        %v1671 = vunpack.c.h.b16 %v1359
        %v1672 = vunpack.c.l.b16 %v1360
        %v1673 = vunpack.c.h.b16 %v1360
        %v1674 = vunpack.c.l.b16 %v1361
        %v1675 = vunpack.c.h.b16 %v1361
        %v1676 = vunpack.c.l.b16 %v1362
        %v1677 = vunpack.c.h.b16 %v1362
        %v1678 = vunpack.c.l.b16 %v1363
        %v1679 = vunpack.c.h.b16 %v1363
        %v1680 = vunpack.c.l.b16 %v1364
        %v1681 = vunpack.c.h.b16 %v1364
        %v1682 = vunpack.c.l.b16 %v1365
        %v1683 = vunpack.c.h.b16 %v1365
        %v1684 = vunpack.c.l.b16 %v1366
        %v1685 = vunpack.c.h.b16 %v1366
        %v1686 = vunpack.c.l.b16 %v1367
        %v1687 = vunpack.c.h.b16 %v1367
        %v1688 = vunpack.c.l.b16 %v1368
        %v1689 = vunpack.c.h.b16 %v1368
        %v1690 = vunpack.c.l.b16 %v1369
        %v1691 = vunpack.c.h.b16 %v1369
        %v1692 = vunpack.c.l.b16 %v1370
        %v1693 = vunpack.c.h.b16 %v1370
        %v1694 = vunpack.c.l.b16 %v1371
        %v1695 = vunpack.c.h.b16 %v1371
        %v1696 = vunpack.c.l.b16 %v1372
        %v1697 = vunpack.c.h.b16 %v1372
        %v1698 = vunpack.c.l.b16 %v1373
        %v1699 = vunpack.c.h.b16 %v1373
        %v1700 = vunpack.c.l.b16 %v1374
        %v1701 = vunpack.c.h.b16 %v1374
        %v1702 = vunpack.c.l.b16 %v1375
        %v1703 = vunpack.c.h.b16 %v1375
        %v1704 = vunpack.c.l.b16 %v1376
        %v1705 = vunpack.c.h.b16 %v1376
        %v1706 = vunpack.c.l.b16 %v1377
        %v1707 = vunpack.c.h.b16 %v1377
        %v1708 = vunpack.c.l.b16 %v1378
        %v1709 = vunpack.c.h.b16 %v1378
        %v1710 = vunpack.c.l.b16 %v1379
        %v1711 = vunpack.c.h.b16 %v1379
        %v1712 = vunpack.c.l.b16 %v1380
        %v1713 = vunpack.c.h.b16 %v1380
        %v1714 = vunpack.c.l.b16 %v1381
        %v1715 = vunpack.c.h.b16 %v1381
        %v1716 = vunpack.c.l.b16 %v1382
        %v1717 = vunpack.c.h.b16 %v1382
        %v1718 = vunpack.c.l.b16 %v1383
        %v1719 = vunpack.c.h.b16 %v1383
        %v1720 = vunpack.c.l.b16 %v1384
        %v1721 = vunpack.c.h.b16 %v1384
        %v1722 = vunpack.c.l.b16 %v1385
        %v1723 = vunpack.c.h.b16 %v1385
        %v1724 = vunpack.c.l.b16 %v1386
        %v1725 = vunpack.c.h.b16 %v1386
        %v1726 = vunpack.c.l.b16 %v1387
        %v1727 = vunpack.c.h.b16 %v1387
        %v1728 = vunpack.c.l.b16 %v1388
        %v1729 = vunpack.c.h.b16 %v1388
        %v1730 = vunpack.c.l.b16 %v1389
        %v1731 = vunpack.c.h.b16 %v1389
        %v1732 = vunpack.c.l.b16 %v1390
        %v1733 = vunpack.c.h.b16 %v1390
        %v1734 = vunpack.c.l.b16 %v1391
        %v1735 = vunpack.c.h.b16 %v1391
        %v1736 = vunpack.c.l.b16 %v1392
        %v1737 = vunpack.c.h.b16 %v1392
        %v1738 = vunpack.c.l.b16 %v1393
        %v1739 = vunpack.c.h.b16 %v1393
        %v1740 = vunpack.c.l.b16 %v1394
        %v1741 = vunpack.c.h.b16 %v1394
        %v1742 = vunpack.c.l.b16 %v1395
        %v1743 = vunpack.c.h.b16 %v1395
        %v1744 = vunpack.c.l.b16 %v1396
        %v1745 = vunpack.c.h.b16 %v1396
        %v1746 = vunpack.c.l.b16 %v1397
        %v1747 = vunpack.c.h.b16 %v1397
        %v1748 = vunpack.c.l.b16 %v1398
        %v1749 = vunpack.c.h.b16 %v1398
        %v1750 = vunpack.c.l.b16 %v1399
        %v1751 = vunpack.c.h.b16 %v1399
        %v1752 = vunpack.c.l.b16 %v1400
        %v1753 = vunpack.c.h.b16 %v1400
        %v1754 = vunpack.c.l.b16 %v1401
        %v1755 = vunpack.c.h.b16 %v1401
        %v1756 = vunpack.c.l.b16 %v1402
        %v1757 = vunpack.c.h.b16 %v1402
        %v1758 = vunpack.c.l.b16 %v1403
        %v1759 = vunpack.c.h.b16 %v1403
        %v1760 = vunpack.c.l.b16 %v1404
        %v1761 = vunpack.c.h.b16 %v1404
        %v1762 = vunpack.c.l.b16 %v1405
        %v1763 = vunpack.c.h.b16 %v1405
        %v1764 = vunpack.c.l.b16 %v1406
        %v1765 = vunpack.c.h.b16 %v1406
        %v1766 = vunpack.c.l.b16 %v1407
        %v1767 = vunpack.c.h.b16 %v1407
        %v1768 = vunpack.c.l.b16 %v1408
        %v1769 = vunpack.c.h.b16 %v1408
        %v1770 = vunpack.c.l.b16 %v1409
        %v1771 = vunpack.c.h.b16 %v1409
        %v1772 = vunpack.c.l.b16 %v1410
        %v1773 = vunpack.c.h.b16 %v1410
        %v1774 = vunpack.c.l.b16 %v1411
        %v1775 = vunpack.c.h.b16 %v1411
        %v1776 = vunpack.c.l.b16 %v1412
        %v1777 = vunpack.c.h.b16 %v1412
        %v1778 = vunpack.c.l.b16 %v1413
        %v1779 = vunpack.c.h.b16 %v1413
        %v1780 = vunpack.c.l.b16 %v1414
        %v1781 = vunpack.c.h.b16 %v1414
        %v1782 = vunpack.c.l.b16 %v1415
        %v1783 = vunpack.c.h.b16 %v1415
        %v1784 = vunpack.c.l.b16 %v1416
        %v1785 = vunpack.c.h.b16 %v1416
        %v1786 = vunpack.c.l.b16 %v1417
        %v1787 = vunpack.c.h.b16 %v1417
        %v1788 = vunpack.c.l.b16 %v1418
        %v1789 = vunpack.c.h.b16 %v1418
        %v1790 = vunpack.c.l.b16 %v1419
        %v1791 = vunpack.c.h.b16 %v1419
        %v1792 = vunpack.c.l.b16 %v1420
        %v1793 = vunpack.c.h.b16 %v1420
        %v1794 = vunpack.c.l.b16 %v1421
        %v1795 = vunpack.c.h.b16 %v1421
        %v1796 = vunpack.c.l.b16 %v1422
        %v1797 = vunpack.c.h.b16 %v1422
        %v1798 = vunpack.c.l.b16 %v1423
        %v1799 = vunpack.c.h.b16 %v1423
        %v1800 = vunpack.c.l.b16 %v1424
        %v1801 = vunpack.c.h.b16 %v1424
        %v1802 = vunpack.c.l.b16 %v1425
        %v1803 = vunpack.c.h.b16 %v1425
        %v1804 = vunpack.c.l.b16 %v1426
        %v1805 = vunpack.c.h.b16 %v1426
        %v1806 = vunpack.c.l.b16 %v1427
        %v1807 = vunpack.c.h.b16 %v1427
        %v1808 = vunpack.c.l.b16 %v1428
        %v1809 = vunpack.c.h.b16 %v1428
        %v1810 = vunpack.c.l.b16 %v1429
        %v1811 = vunpack.c.h.b16 %v1429
        %v1812 = vunpack.c.l.b16 %v1430
        %v1813 = vunpack.c.h.b16 %v1430
        %v1814 = vunpack.c.l.b16 %v1431
        %v1815 = vunpack.c.h.b16 %v1431
        %v1816 = vpack.c.b16 %v1568, %v1560
        %v1817 = vpack.c.b16 %v1569, %v1561
        %v1818 = vpack.c.b16 %v1570, %v1562
        %v1819 = vpack.c.b16 %v1571, %v1563
        %v1820 = vpack.c.b16 %v1572, %v1564
        %v1821 = vpack.c.b16 %v1573, %v1565
        %v1822 = vpack.c.b16 %v1574, %v1566
        %v1823 = vpack.c.b16 %v1575, %v1567
        %v1824 = vpack.c.b16 %v1584, %v1576
        %v1825 = vpack.c.b16 %v1585, %v1577
        %v1826 = vpack.c.b16 %v1586, %v1578
        %v1827 = vpack.c.b16 %v1587, %v1579
        %v1828 = vpack.c.b16 %v1588, %v1580
        %v1829 = vpack.c.b16 %v1589, %v1581
        %v1830 = vpack.c.b16 %v1590, %v1582
        %v1831 = vpack.c.b16 %v1591, %v1583
        %v1832 = vpack.c.b16 %v1600, %v1592
        %v1833 = vpack.c.b16 %v1601, %v1593
        %v1834 = vpack.c.b16 %v1602, %v1594
        %v1835 = vpack.c.b16 %v1603, %v1595
        %v1836 = vpack.c.b16 %v1604, %v1596
        %v1837 = vpack.c.b16 %v1605, %v1597
        %v1838 = vpack.c.b16 %v1606, %v1598
        %v1839 = vpack.c.b16 %v1607, %v1599
        %v1840 = vpack.c.b16 %v1616, %v1608
        %v1841 = vpack.c.b16 %v1617, %v1609
        %v1842 = vpack.c.b16 %v1618, %v1610
        %v1843 = vpack.c.b16 %v1619, %v1611
        %v1844 = vpack.c.b16 %v1620, %v1612
        %v1845 = vpack.c.b16 %v1621, %v1613
        %v1846 = vpack.c.b16 %v1622, %v1614
        %v1847 = vpack.c.b16 %v1623, %v1615
        %v1848 = vpack.c.b16 %v1632, %v1624
        %v1849 = vpack.c.b16 %v1633, %v1625
        %v1850 = vpack.c.b16 %v1634, %v1626
        %v1851 = vpack.c.b16 %v1635, %v1627
        %v1852 = vpack.c.b16 %v1636, %v1628
        %v1853 = vpack.c.b16 %v1637, %v1629
        %v1854 = vpack.c.b16 %v1638, %v1630
        %v1855 = vpack.c.b16 %v1639, %v1631
        %v1856 = vpack.c.b16 %v1648, %v1640
        %v1857 = vpack.c.b16 %v1649, %v1641
        %v1858 = vpack.c.b16 %v1650, %v1642
        %v1859 = vpack.c.b16 %v1651, %v1643
        %v1860 = vpack.c.b16 %v1652, %v1644
        %v1861 = vpack.c.b16 %v1653, %v1645
        %v1862 = vpack.c.b16 %v1654, %v1646
        %v1863 = vpack.c.b16 %v1655, %v1647
        %v1864 = vpack.c.b16 %v1664, %v1656
        %v1865 = vpack.c.b16 %v1665, %v1657
        %v1866 = vpack.c.b16 %v1666, %v1658
        %v1867 = vpack.c.b16 %v1667, %v1659
        %v1868 = vpack.c.b16 %v1668, %v1660
        %v1869 = vpack.c.b16 %v1669, %v1661
        %v1870 = vpack.c.b16 %v1670, %v1662
        %v1871 = vpack.c.b16 %v1671, %v1663
        %v1872 = vpack.c.b16 %v1680, %v1672
        %v1873 = vpack.c.b16 %v1681, %v1673
        %v1874 = vpack.c.b16 %v1682, %v1674
        %v1875 = vpack.c.b16 %v1683, %v1675
        %v1876 = vpack.c.b16 %v1684, %v1676
        %v1877 = vpack.c.b16 %v1685, %v1677
        %v1878 = vpack.c.b16 %v1686, %v1678
        %v1879 = vpack.c.b16 %v1687, %v1679
        %v1880 = vpack.c.b16 %v1696, %v1688
        %v1881 = vpack.c.b16 %v1697, %v1689
        %v1882 = vpack.c.b16 %v1698, %v1690
        %v1883 = vpack.c.b16 %v1699, %v1691
        %v1884 = vpack.c.b16 %v1700, %v1692
        %v1885 = vpack.c.b16 %v1701, %v1693
        %v1886 = vpack.c.b16 %v1702, %v1694
        %v1887 = vpack.c.b16 %v1703, %v1695
        %v1888 = vpack.c.b16 %v1712, %v1704
        %v1889 = vpack.c.b16 %v1713, %v1705
        %v1890 = vpack.c.b16 %v1714, %v1706
        %v1891 = vpack.c.b16 %v1715, %v1707
        %v1892 = vpack.c.b16 %v1716, %v1708
        %v1893 = vpack.c.b16 %v1717, %v1709
        %v1894 = vpack.c.b16 %v1718, %v1710
        %v1895 = vpack.c.b16 %v1719, %v1711
        %v1896 = vpack.c.b16 %v1728, %v1720
        %v1897 = vpack.c.b16 %v1729, %v1721
        %v1898 = vpack.c.b16 %v1730, %v1722
        %v1899 = vpack.c.b16 %v1731, %v1723
        %v1900 = vpack.c.b16 %v1732, %v1724
        %v1901 = vpack.c.b16 %v1733, %v1725
        %v1902 = vpack.c.b16 %v1734, %v1726
        %v1903 = vpack.c.b16 %v1735, %v1727
        %v1904 = vpack.c.b16 %v1744, %v1736
        %v1905 = vpack.c.b16 %v1745, %v1737
        %v1906 = vpack.c.b16 %v1746, %v1738
        %v1907 = vpack.c.b16 %v1747, %v1739
        %v1908 = vpack.c.b16 %v1748, %v1740
        %v1909 = vpack.c.b16 %v1749, %v1741
        %v1910 = vpack.c.b16 %v1750, %v1742
        %v1911 = vpack.c.b16 %v1751, %v1743
        %v1912 = vpack.c.b16 %v1760, %v1752
        %v1913 = vpack.c.b16 %v1761, %v1753
        %v1914 = vpack.c.b16 %v1762, %v1754
        %v1915 = vpack.c.b16 %v1763, %v1755
        %v1916 = vpack.c.b16 %v1764, %v1756
        %v1917 = vpack.c.b16 %v1765, %v1757
        %v1918 = vpack.c.b16 %v1766, %v1758
        %v1919 = vpack.c.b16 %v1767, %v1759
        %v1920 = vpack.c.b16 %v1776, %v1768
        %v1921 = vpack.c.b16 %v1777, %v1769
        %v1922 = vpack.c.b16 %v1778, %v1770
        %v1923 = vpack.c.b16 %v1779, %v1771
        %v1924 = vpack.c.b16 %v1780, %v1772
        %v1925 = vpack.c.b16 %v1781, %v1773
        %v1926 = vpack.c.b16 %v1782, %v1774
        %v1927 = vpack.c.b16 %v1783, %v1775
        %v1928 = vpack.c.b16 %v1792, %v1784
        %v1929 = vpack.c.b16 %v1793, %v1785
        %v1930 = vpack.c.b16 %v1794, %v1786
        %v1931 = vpack.c.b16 %v1795, %v1787
        %v1932 = vpack.c.b16 %v1796, %v1788
        %v1933 = vpack.c.b16 %v1797, %v1789
        %v1934 = vpack.c.b16 %v1798, %v1790
        %v1935 = vpack.c.b16 %v1799, %v1791
        %v1936 = vpack.c.b16 %v1808, %v1800
        %v1937 = vpack.c.b16 %v1809, %v1801
        %v1938 = vpack.c.b16 %v1810, %v1802
        %v1939 = vpack.c.b16 %v1811, %v1803
        %v1940 = vpack.c.b16 %v1812, %v1804
        %v1941 = vpack.c.b16 %v1813, %v1805
        %v1942 = vpack.c.b16 %v1814, %v1806
        %v1943 = vpack.c.b16 %v1815, %v1807
        %2072 = vmatpush.bf16.msra.mxu0 %v1872
        %2073 = vmatpush.bf16.msra.mxu0 %v1864
        %2074 = vmatpush.bf16.msra.mxu0 %v1856
        %2075 = vmatpush.bf16.msra.mxu0 %v1848
        %2076 = vmatpush.bf16.msra.mxu0 %v1840
        %2077 = vmatpush.bf16.msra.mxu0 %v1832
        %2078 = vmatpush.bf16.msra.mxu0 %v1824
        %2079 = vmatpush.bf16.msra.mxu0 %v1816
        %2080 = vmatmul.bf16.gmra.mxu0 %v1302
        %v2081 = vpop.f32.mrf.mxu0
        %v2082 = vadd.f32 0.0, %v2081
        %v2083 = vpop.f32.mrf.mxu0
        %2084 = vdwg.mxu0
        %2085 = vmatpush.bf16.msra.mxu0 %v1936
        %2086 = vmatpush.bf16.msra.mxu0 %v1928
        %2087 = vmatpush.bf16.msra.mxu0 %v1920
        %2088 = vmatpush.bf16.msra.mxu0 %v1912
        %2089 = vmatpush.bf16.msra.mxu0 %v1904
        %2090 = vmatpush.bf16.msra.mxu0 %v1896
        %2091 = vmatpush.bf16.msra.mxu0 %v1888
        %2092 = vmatpush.bf16.msra.mxu0 %v1880
        %2093 = vmatmul.bf16.gmra.mxu0 %v1303
        %v2094 = vpop.f32.mrf.mxu0
        %v2095 = vadd.f32 %v2082, %v2094
        %v2096 = vpop.f32.mrf.mxu0
        %2097 = vdwg.mxu0
        %2098 = vmatpush.bf16.msra.mxu0 %v1873
        %2099 = vmatpush.bf16.msra.mxu0 %v1865
        %2100 = vmatpush.bf16.msra.mxu0 %v1857
        %2101 = vmatpush.bf16.msra.mxu0 %v1849
        %2102 = vmatpush.bf16.msra.mxu0 %v1841
        %2103 = vmatpush.bf16.msra.mxu0 %v1833
        %2104 = vmatpush.bf16.msra.mxu0 %v1825
        %2105 = vmatpush.bf16.msra.mxu0 %v1817
        %2106 = vmatmul.bf16.gmra.mxu0 %v1302
        %v2107 = vpop.f32.mrf.mxu0
        %v2108 = vadd.f32 0.0, %v2107
        %v2109 = vpop.f32.mrf.mxu0
        %2110 = vdwg.mxu0
        %2111 = vmatpush.bf16.msra.mxu0 %v1937
        %2112 = vmatpush.bf16.msra.mxu0 %v1929
        %2113 = vmatpush.bf16.msra.mxu0 %v1921
        %2114 = vmatpush.bf16.msra.mxu0 %v1913
        %2115 = vmatpush.bf16.msra.mxu0 %v1905
        %2116 = vmatpush.bf16.msra.mxu0 %v1897
        %2117 = vmatpush.bf16.msra.mxu0 %v1889
        %2118 = vmatpush.bf16.msra.mxu0 %v1881
        %2119 = vmatmul.bf16.gmra.mxu0 %v1303
        %v2120 = vpop.f32.mrf.mxu0
        %v2121 = vadd.f32 %v2108, %v2120
        %v2122 = vpop.f32.mrf.mxu0
        %2123 = vdwg.mxu0
        %2124 = vmatpush.bf16.msra.mxu0 %v1874
        %2125 = vmatpush.bf16.msra.mxu0 %v1866
        %2126 = vmatpush.bf16.msra.mxu0 %v1858
        %2127 = vmatpush.bf16.msra.mxu0 %v1850
        %2128 = vmatpush.bf16.msra.mxu0 %v1842
        %2129 = vmatpush.bf16.msra.mxu0 %v1834
        %2130 = vmatpush.bf16.msra.mxu0 %v1826
        %2131 = vmatpush.bf16.msra.mxu0 %v1818
        %2132 = vmatmul.bf16.gmra.mxu0 %v1302
        %v2133 = vpop.f32.mrf.mxu0
        %v2134 = vadd.f32 0.0, %v2133
        %v2135 = vpop.f32.mrf.mxu0
        %2136 = vdwg.mxu0
        %2137 = vmatpush.bf16.msra.mxu0 %v1938
        %2138 = vmatpush.bf16.msra.mxu0 %v1930
        %2139 = vmatpush.bf16.msra.mxu0 %v1922
        %2140 = vmatpush.bf16.msra.mxu0 %v1914
        %2141 = vmatpush.bf16.msra.mxu0 %v1906
        %2142 = vmatpush.bf16.msra.mxu0 %v1898
        %2143 = vmatpush.bf16.msra.mxu0 %v1890
        %2144 = vmatpush.bf16.msra.mxu0 %v1882
        %2145 = vmatmul.bf16.gmra.mxu0 %v1303
        %v2146 = vpop.f32.mrf.mxu0
        %v2147 = vadd.f32 %v2134, %v2146
        %v2148 = vpop.f32.mrf.mxu0
        %2149 = vdwg.mxu0
        %2150 = vmatpush.bf16.msra.mxu0 %v1875
        %2151 = vmatpush.bf16.msra.mxu0 %v1867
        %2152 = vmatpush.bf16.msra.mxu0 %v1859
        %2153 = vmatpush.bf16.msra.mxu0 %v1851
        %2154 = vmatpush.bf16.msra.mxu0 %v1843
        %2155 = vmatpush.bf16.msra.mxu0 %v1835
        %2156 = vmatpush.bf16.msra.mxu0 %v1827
        %2157 = vmatpush.bf16.msra.mxu0 %v1819
        %2158 = vmatmul.bf16.gmra.mxu0 %v1302
        %v2159 = vpop.f32.mrf.mxu0
        %v2160 = vadd.f32 0.0, %v2159
        %v2161 = vpop.f32.mrf.mxu0
        %2162 = vdwg.mxu0
        %2163 = vmatpush.bf16.msra.mxu0 %v1939
        %2164 = vmatpush.bf16.msra.mxu0 %v1931
        %2165 = vmatpush.bf16.msra.mxu0 %v1923
        %2166 = vmatpush.bf16.msra.mxu0 %v1915
        %2167 = vmatpush.bf16.msra.mxu0 %v1907
        %2168 = vmatpush.bf16.msra.mxu0 %v1899
        %2169 = vmatpush.bf16.msra.mxu0 %v1891
        %2170 = vmatpush.bf16.msra.mxu0 %v1883
        %2171 = vmatmul.bf16.gmra.mxu0 %v1303
        %v2172 = vpop.f32.mrf.mxu0
        %v2173 = vadd.f32 %v2160, %v2172
        %v2174 = vpop.f32.mrf.mxu0
        %2175 = vdwg.mxu0
        %2176 = vmatpush.bf16.msra.mxu0 %v1876
        %2177 = vmatpush.bf16.msra.mxu0 %v1868
        %2178 = vmatpush.bf16.msra.mxu0 %v1860
        %2179 = vmatpush.bf16.msra.mxu0 %v1852
        %2180 = vmatpush.bf16.msra.mxu0 %v1844
        %2181 = vmatpush.bf16.msra.mxu0 %v1836
        %2182 = vmatpush.bf16.msra.mxu0 %v1828
        %2183 = vmatpush.bf16.msra.mxu0 %v1820
        %2184 = vmatmul.bf16.gmra.mxu0 %v1302
        %v2185 = vpop.f32.mrf.mxu0
        %v2186 = vadd.f32 0.0, %v2185
        %v2187 = vpop.f32.mrf.mxu0
        %2188 = vdwg.mxu0
        %2189 = vmatpush.bf16.msra.mxu0 %v1940
        %2190 = vmatpush.bf16.msra.mxu0 %v1932
        %2191 = vmatpush.bf16.msra.mxu0 %v1924
        %2192 = vmatpush.bf16.msra.mxu0 %v1916
        %2193 = vmatpush.bf16.msra.mxu0 %v1908
        %2194 = vmatpush.bf16.msra.mxu0 %v1900
        %2195 = vmatpush.bf16.msra.mxu0 %v1892
        %2196 = vmatpush.bf16.msra.mxu0 %v1884
        %2197 = vmatmul.bf16.gmra.mxu0 %v1303
        %v2198 = vpop.f32.mrf.mxu0
        %v2199 = vadd.f32 %v2186, %v2198
        %v2200 = vpop.f32.mrf.mxu0
        %2201 = vdwg.mxu0
        %2202 = vmatpush.bf16.msra.mxu0 %v1877
        %2203 = vmatpush.bf16.msra.mxu0 %v1869
        %2204 = vmatpush.bf16.msra.mxu0 %v1861
        %2205 = vmatpush.bf16.msra.mxu0 %v1853
        %2206 = vmatpush.bf16.msra.mxu0 %v1845
        %2207 = vmatpush.bf16.msra.mxu0 %v1837
        %2208 = vmatpush.bf16.msra.mxu0 %v1829
        %2209 = vmatpush.bf16.msra.mxu0 %v1821
        %2210 = vmatmul.bf16.gmra.mxu0 %v1302
        %v2211 = vpop.f32.mrf.mxu0
        %v2212 = vadd.f32 0.0, %v2211
        %v2213 = vpop.f32.mrf.mxu0
        %2214 = vdwg.mxu0
        %2215 = vmatpush.bf16.msra.mxu0 %v1941
        %2216 = vmatpush.bf16.msra.mxu0 %v1933
        %2217 = vmatpush.bf16.msra.mxu0 %v1925
        %2218 = vmatpush.bf16.msra.mxu0 %v1917
        %2219 = vmatpush.bf16.msra.mxu0 %v1909
        %2220 = vmatpush.bf16.msra.mxu0 %v1901
        %2221 = vmatpush.bf16.msra.mxu0 %v1893
        %2222 = vmatpush.bf16.msra.mxu0 %v1885
        %2223 = vmatmul.bf16.gmra.mxu0 %v1303
        %v2224 = vpop.f32.mrf.mxu0
        %v2225 = vadd.f32 %v2212, %v2224
        %v2226 = vpop.f32.mrf.mxu0
        %2227 = vdwg.mxu0
        %2228 = vmatpush.bf16.msra.mxu0 %v1878
        %2229 = vmatpush.bf16.msra.mxu0 %v1870
        %2230 = vmatpush.bf16.msra.mxu0 %v1862
        %2231 = vmatpush.bf16.msra.mxu0 %v1854
        %2232 = vmatpush.bf16.msra.mxu0 %v1846
        %2233 = vmatpush.bf16.msra.mxu0 %v1838
        %2234 = vmatpush.bf16.msra.mxu0 %v1830
        %2235 = vmatpush.bf16.msra.mxu0 %v1822
        %2236 = vmatmul.bf16.gmra.mxu0 %v1302
        %v2237 = vpop.f32.mrf.mxu0
        %v2238 = vadd.f32 0.0, %v2237
        %v2239 = vpop.f32.mrf.mxu0
        %2240 = vdwg.mxu0
        %2241 = vmatpush.bf16.msra.mxu0 %v1942
        %2242 = vmatpush.bf16.msra.mxu0 %v1934
        %2243 = vmatpush.bf16.msra.mxu0 %v1926
        %2244 = vmatpush.bf16.msra.mxu0 %v1918
        %2245 = vmatpush.bf16.msra.mxu0 %v1910
        %2246 = vmatpush.bf16.msra.mxu0 %v1902
        %2247 = vmatpush.bf16.msra.mxu0 %v1894
        %2248 = vmatpush.bf16.msra.mxu0 %v1886
        %2249 = vmatmul.bf16.gmra.mxu0 %v1303
        %v2250 = vpop.f32.mrf.mxu0
        %v2251 = vadd.f32 %v2238, %v2250
        %v2252 = vpop.f32.mrf.mxu0
        %2253 = vdwg.mxu0
        %2254 = vmatpush.bf16.msra.mxu0 %v1879
        %2255 = vmatpush.bf16.msra.mxu0 %v1871
        %2256 = vmatpush.bf16.msra.mxu0 %v1863
        %2257 = vmatpush.bf16.msra.mxu0 %v1855
        %2258 = vmatpush.bf16.msra.mxu0 %v1847
        %2259 = vmatpush.bf16.msra.mxu0 %v1839
        %2260 = vmatpush.bf16.msra.mxu0 %v1831
        %2261 = vmatpush.bf16.msra.mxu0 %v1823
        %2262 = vmatmul.bf16.gmra.mxu0 %v1302
        %v2263 = vpop.f32.mrf.mxu0
        %v2264 = vadd.f32 0.0, %v2263
        %v2265 = vpop.f32.mrf.mxu0
        %2266 = vdwg.mxu0
        %2267 = vmatpush.bf16.msra.mxu0 %v1943
        %2268 = vmatpush.bf16.msra.mxu0 %v1935
        %2269 = vmatpush.bf16.msra.mxu0 %v1927
        %2270 = vmatpush.bf16.msra.mxu0 %v1919
        %2271 = vmatpush.bf16.msra.mxu0 %v1911
        %2272 = vmatpush.bf16.msra.mxu0 %v1903
        %2273 = vmatpush.bf16.msra.mxu0 %v1895
        %2274 = vmatpush.bf16.msra.mxu0 %v1887
        %2275 = vmatmul.bf16.gmra.mxu0 %v1303
        %v2276 = vpop.f32.mrf.mxu0
        %v2277 = vadd.f32 %v2264, %v2276
        %v2278 = vpop.f32.mrf.mxu0
        %2279 = vdwg.mxu0
        %v2344 = vunpack.c.l.b16 %v1232
        %v2345 = vunpack.c.h.b16 %v1232
        %v2346 = vunpack.c.l.b16 %v1233
        %v2347 = vunpack.c.h.b16 %v1233
        %v2348 = vunpack.c.l.b16 %v1234
        %v2349 = vunpack.c.h.b16 %v1234
        %v2350 = vunpack.c.l.b16 %v1235
        %v2351 = vunpack.c.h.b16 %v1235
        %v2352 = vunpack.c.l.b16 %v1236
        %v2353 = vunpack.c.h.b16 %v1236
        %v2354 = vunpack.c.l.b16 %v1237
        %v2355 = vunpack.c.h.b16 %v1237
        %v2356 = vunpack.c.l.b16 %v1238
        %v2357 = vunpack.c.h.b16 %v1238
        %v2358 = vunpack.c.l.b16 %v1239
        %v2359 = vunpack.c.h.b16 %v1239
        %v2360 = vunpack.c.l.b16 %v1240
        %v2361 = vunpack.c.h.b16 %v1240
        %v2362 = vunpack.c.l.b16 %v1241
        %v2363 = vunpack.c.h.b16 %v1241
        %v2364 = vunpack.c.l.b16 %v1242
        %v2365 = vunpack.c.h.b16 %v1242
        %v2366 = vunpack.c.l.b16 %v1243
        %v2367 = vunpack.c.h.b16 %v1243
        %v2368 = vunpack.c.l.b16 %v1244
        %v2369 = vunpack.c.h.b16 %v1244
        %v2370 = vunpack.c.l.b16 %v1245
        %v2371 = vunpack.c.h.b16 %v1245
        %v2372 = vunpack.c.l.b16 %v1246
        %v2373 = vunpack.c.h.b16 %v1246
        %v2374 = vunpack.c.l.b16 %v1247
        %v2375 = vunpack.c.h.b16 %v1247
        %v2376 = vunpack.c.l.b16 %v1248
        %v2377 = vunpack.c.h.b16 %v1248
        %v2378 = vunpack.c.l.b16 %v1249
        %v2379 = vunpack.c.h.b16 %v1249
        %v2380 = vunpack.c.l.b16 %v1250
        %v2381 = vunpack.c.h.b16 %v1250
        %v2382 = vunpack.c.l.b16 %v1251
        %v2383 = vunpack.c.h.b16 %v1251
        %v2384 = vunpack.c.l.b16 %v1252
        %v2385 = vunpack.c.h.b16 %v1252
        %v2386 = vunpack.c.l.b16 %v1253
        %v2387 = vunpack.c.h.b16 %v1253
        %v2388 = vunpack.c.l.b16 %v1254
        %v2389 = vunpack.c.h.b16 %v1254
        %v2390 = vunpack.c.l.b16 %v1255
        %v2391 = vunpack.c.h.b16 %v1255
        %v2392 = vunpack.c.l.b16 %v1256
        %v2393 = vunpack.c.h.b16 %v1256
        %v2394 = vunpack.c.l.b16 %v1257
        %v2395 = vunpack.c.h.b16 %v1257
        %v2396 = vunpack.c.l.b16 %v1258
        %v2397 = vunpack.c.h.b16 %v1258
        %v2398 = vunpack.c.l.b16 %v1259
        %v2399 = vunpack.c.h.b16 %v1259
        %v2400 = vunpack.c.l.b16 %v1260
        %v2401 = vunpack.c.h.b16 %v1260
        %v2402 = vunpack.c.l.b16 %v1261
        %v2403 = vunpack.c.h.b16 %v1261
        %v2404 = vunpack.c.l.b16 %v1262
        %v2405 = vunpack.c.h.b16 %v1262
        %v2406 = vunpack.c.l.b16 %v1263
        %v2407 = vunpack.c.h.b16 %v1263
        %v2408 = vunpack.c.l.b16 %v1264
        %v2409 = vunpack.c.h.b16 %v1264
        %v2410 = vunpack.c.l.b16 %v1265
        %v2411 = vunpack.c.h.b16 %v1265
        %v2412 = vunpack.c.l.b16 %v1266
        %v2413 = vunpack.c.h.b16 %v1266
        %v2414 = vunpack.c.l.b16 %v1267
        %v2415 = vunpack.c.h.b16 %v1267
        %v2416 = vunpack.c.l.b16 %v1268
        %v2417 = vunpack.c.h.b16 %v1268
        %v2418 = vunpack.c.l.b16 %v1269
        %v2419 = vunpack.c.h.b16 %v1269
        %v2420 = vunpack.c.l.b16 %v1270
        %v2421 = vunpack.c.h.b16 %v1270
        %v2422 = vunpack.c.l.b16 %v1271
        %v2423 = vunpack.c.h.b16 %v1271
        %v2424 = vunpack.c.l.b16 %v1272
        %v2425 = vunpack.c.h.b16 %v1272
        %v2426 = vunpack.c.l.b16 %v1273
        %v2427 = vunpack.c.h.b16 %v1273
        %v2428 = vunpack.c.l.b16 %v1274
        %v2429 = vunpack.c.h.b16 %v1274
        %v2430 = vunpack.c.l.b16 %v1275
        %v2431 = vunpack.c.h.b16 %v1275
        %v2432 = vunpack.c.l.b16 %v1276
        %v2433 = vunpack.c.h.b16 %v1276
        %v2434 = vunpack.c.l.b16 %v1277
        %v2435 = vunpack.c.h.b16 %v1277
        %v2436 = vunpack.c.l.b16 %v1278
        %v2437 = vunpack.c.h.b16 %v1278
        %v2438 = vunpack.c.l.b16 %v1279
        %v2439 = vunpack.c.h.b16 %v1279
        %v2440 = vunpack.c.l.b16 %v1280
        %v2441 = vunpack.c.h.b16 %v1280
        %v2442 = vunpack.c.l.b16 %v1281
        %v2443 = vunpack.c.h.b16 %v1281
        %v2444 = vunpack.c.l.b16 %v1282
        %v2445 = vunpack.c.h.b16 %v1282
        %v2446 = vunpack.c.l.b16 %v1283
        %v2447 = vunpack.c.h.b16 %v1283
        %v2448 = vunpack.c.l.b16 %v1284
        %v2449 = vunpack.c.h.b16 %v1284
        %v2450 = vunpack.c.l.b16 %v1285
        %v2451 = vunpack.c.h.b16 %v1285
        %v2452 = vunpack.c.l.b16 %v1286
        %v2453 = vunpack.c.h.b16 %v1286
        %v2454 = vunpack.c.l.b16 %v1287
        %v2455 = vunpack.c.h.b16 %v1287
        %v2456 = vunpack.c.l.b16 %v1288
        %v2457 = vunpack.c.h.b16 %v1288
        %v2458 = vunpack.c.l.b16 %v1289
        %v2459 = vunpack.c.h.b16 %v1289
        %v2460 = vunpack.c.l.b16 %v1290
        %v2461 = vunpack.c.h.b16 %v1290
        %v2462 = vunpack.c.l.b16 %v1291
        %v2463 = vunpack.c.h.b16 %v1291
        %v2464 = vunpack.c.l.b16 %v1292
        %v2465 = vunpack.c.h.b16 %v1292
        %v2466 = vunpack.c.l.b16 %v1293
        %v2467 = vunpack.c.h.b16 %v1293
        %v2468 = vunpack.c.l.b16 %v1294
        %v2469 = vunpack.c.h.b16 %v1294
        %v2470 = vunpack.c.l.b16 %v1295
        %v2471 = vunpack.c.h.b16 %v1295
        %v2472 = vpack.c.b16 %v2352, %v2344
        %v2473 = vpack.c.b16 %v2353, %v2345
        %v2474 = vpack.c.b16 %v2354, %v2346
        %v2475 = vpack.c.b16 %v2355, %v2347
        %v2476 = vpack.c.b16 %v2356, %v2348
        %v2477 = vpack.c.b16 %v2357, %v2349
        %v2478 = vpack.c.b16 %v2358, %v2350
        %v2479 = vpack.c.b16 %v2359, %v2351
        %v2480 = vpack.c.b16 %v2368, %v2360
        %v2481 = vpack.c.b16 %v2369, %v2361
        %v2482 = vpack.c.b16 %v2370, %v2362
        %v2483 = vpack.c.b16 %v2371, %v2363
        %v2484 = vpack.c.b16 %v2372, %v2364
        %v2485 = vpack.c.b16 %v2373, %v2365
        %v2486 = vpack.c.b16 %v2374, %v2366
        %v2487 = vpack.c.b16 %v2375, %v2367
        %v2488 = vpack.c.b16 %v2384, %v2376
        %v2489 = vpack.c.b16 %v2385, %v2377
        %v2490 = vpack.c.b16 %v2386, %v2378
        %v2491 = vpack.c.b16 %v2387, %v2379
        %v2492 = vpack.c.b16 %v2388, %v2380
        %v2493 = vpack.c.b16 %v2389, %v2381
        %v2494 = vpack.c.b16 %v2390, %v2382
        %v2495 = vpack.c.b16 %v2391, %v2383
        %v2496 = vpack.c.b16 %v2400, %v2392
        %v2497 = vpack.c.b16 %v2401, %v2393
        %v2498 = vpack.c.b16 %v2402, %v2394
        %v2499 = vpack.c.b16 %v2403, %v2395
        %v2500 = vpack.c.b16 %v2404, %v2396
        %v2501 = vpack.c.b16 %v2405, %v2397
        %v2502 = vpack.c.b16 %v2406, %v2398
        %v2503 = vpack.c.b16 %v2407, %v2399
        %v2504 = vpack.c.b16 %v2416, %v2408
        %v2505 = vpack.c.b16 %v2417, %v2409
        %v2506 = vpack.c.b16 %v2418, %v2410
        %v2507 = vpack.c.b16 %v2419, %v2411
        %v2508 = vpack.c.b16 %v2420, %v2412
        %v2509 = vpack.c.b16 %v2421, %v2413
        %v2510 = vpack.c.b16 %v2422, %v2414
        %v2511 = vpack.c.b16 %v2423, %v2415
        %v2512 = vpack.c.b16 %v2432, %v2424
        %v2513 = vpack.c.b16 %v2433, %v2425
        %v2514 = vpack.c.b16 %v2434, %v2426
        %v2515 = vpack.c.b16 %v2435, %v2427
        %v2516 = vpack.c.b16 %v2436, %v2428
        %v2517 = vpack.c.b16 %v2437, %v2429
        %v2518 = vpack.c.b16 %v2438, %v2430
        %v2519 = vpack.c.b16 %v2439, %v2431
        %v2520 = vpack.c.b16 %v2448, %v2440
        %v2521 = vpack.c.b16 %v2449, %v2441
        %v2522 = vpack.c.b16 %v2450, %v2442
        %v2523 = vpack.c.b16 %v2451, %v2443
        %v2524 = vpack.c.b16 %v2452, %v2444
        %v2525 = vpack.c.b16 %v2453, %v2445
        %v2526 = vpack.c.b16 %v2454, %v2446
        %v2527 = vpack.c.b16 %v2455, %v2447
        %v2528 = vpack.c.b16 %v2464, %v2456
        %v2529 = vpack.c.b16 %v2465, %v2457
        %v2530 = vpack.c.b16 %v2466, %v2458
        %v2531 = vpack.c.b16 %v2467, %v2459
        %v2532 = vpack.c.b16 %v2468, %v2460
        %v2533 = vpack.c.b16 %v2469, %v2461
        %v2534 = vpack.c.b16 %v2470, %v2462
        %v2535 = vpack.c.b16 %v2471, %v2463
        %2600 = vmatpush.bf16.msra.mxu0 %v2528
        %2601 = vmatpush.bf16.msra.mxu0 %v2520
        %2602 = vmatpush.bf16.msra.mxu0 %v2512
        %2603 = vmatpush.bf16.msra.mxu0 %v2504
        %2604 = vmatpush.bf16.msra.mxu0 %v2496
        %2605 = vmatpush.bf16.msra.mxu0 %v2488
        %2606 = vmatpush.bf16.msra.mxu0 %v2480
        %2607 = vmatpush.bf16.msra.mxu0 %v2472
        %2608 = vmatmul.bf16.gmra.mxu0 %v1231
        %v2609 = vpop.f32.mrf.mxu0
        %v2610 = vadd.f32 %v2095, %v2609
        %v2611 = vpop.f32.mrf.mxu0
        %2612 = vdwg.mxu0
        %2613 = vmatpush.bf16.msra.mxu0 %v2529
        %2614 = vmatpush.bf16.msra.mxu0 %v2521
        %2615 = vmatpush.bf16.msra.mxu0 %v2513
        %2616 = vmatpush.bf16.msra.mxu0 %v2505
        %2617 = vmatpush.bf16.msra.mxu0 %v2497
        %2618 = vmatpush.bf16.msra.mxu0 %v2489
        %2619 = vmatpush.bf16.msra.mxu0 %v2481
        %2620 = vmatpush.bf16.msra.mxu0 %v2473
        %2621 = vmatmul.bf16.gmra.mxu0 %v1231
        %v2622 = vpop.f32.mrf.mxu0
        %v2623 = vadd.f32 %v2121, %v2622
        %v2624 = vpop.f32.mrf.mxu0
        %2625 = vdwg.mxu0
        %2626 = vmatpush.bf16.msra.mxu0 %v2530
        %2627 = vmatpush.bf16.msra.mxu0 %v2522
        %2628 = vmatpush.bf16.msra.mxu0 %v2514
        %2629 = vmatpush.bf16.msra.mxu0 %v2506
        %2630 = vmatpush.bf16.msra.mxu0 %v2498
        %2631 = vmatpush.bf16.msra.mxu0 %v2490
        %2632 = vmatpush.bf16.msra.mxu0 %v2482
        %2633 = vmatpush.bf16.msra.mxu0 %v2474
        %2634 = vmatmul.bf16.gmra.mxu0 %v1231
        %v2635 = vpop.f32.mrf.mxu0
        %v2636 = vadd.f32 %v2147, %v2635
        %v2637 = vpop.f32.mrf.mxu0
        %2638 = vdwg.mxu0
        %2639 = vmatpush.bf16.msra.mxu0 %v2531
        %2640 = vmatpush.bf16.msra.mxu0 %v2523
        %2641 = vmatpush.bf16.msra.mxu0 %v2515
        %2642 = vmatpush.bf16.msra.mxu0 %v2507
        %2643 = vmatpush.bf16.msra.mxu0 %v2499
        %2644 = vmatpush.bf16.msra.mxu0 %v2491
        %2645 = vmatpush.bf16.msra.mxu0 %v2483
        %2646 = vmatpush.bf16.msra.mxu0 %v2475
        %2647 = vmatmul.bf16.gmra.mxu0 %v1231
        %v2648 = vpop.f32.mrf.mxu0
        %v2649 = vadd.f32 %v2173, %v2648
        %v2650 = vpop.f32.mrf.mxu0
        %2651 = vdwg.mxu0
        %2652 = vmatpush.bf16.msra.mxu0 %v2532
        %2653 = vmatpush.bf16.msra.mxu0 %v2524
        %2654 = vmatpush.bf16.msra.mxu0 %v2516
        %2655 = vmatpush.bf16.msra.mxu0 %v2508
        %2656 = vmatpush.bf16.msra.mxu0 %v2500
        %2657 = vmatpush.bf16.msra.mxu0 %v2492
        %2658 = vmatpush.bf16.msra.mxu0 %v2484
        %2659 = vmatpush.bf16.msra.mxu0 %v2476
        %2660 = vmatmul.bf16.gmra.mxu0 %v1231
        %v2661 = vpop.f32.mrf.mxu0
        %v2662 = vadd.f32 %v2199, %v2661
        %v2663 = vpop.f32.mrf.mxu0
        %2664 = vdwg.mxu0
        %2665 = vmatpush.bf16.msra.mxu0 %v2533
        %2666 = vmatpush.bf16.msra.mxu0 %v2525
        %2667 = vmatpush.bf16.msra.mxu0 %v2517
        %2668 = vmatpush.bf16.msra.mxu0 %v2509
        %2669 = vmatpush.bf16.msra.mxu0 %v2501
        %2670 = vmatpush.bf16.msra.mxu0 %v2493
        %2671 = vmatpush.bf16.msra.mxu0 %v2485
        %2672 = vmatpush.bf16.msra.mxu0 %v2477
        %2673 = vmatmul.bf16.gmra.mxu0 %v1231
        %v2674 = vpop.f32.mrf.mxu0
        %v2675 = vadd.f32 %v2225, %v2674
        %v2676 = vpop.f32.mrf.mxu0
        %2677 = vdwg.mxu0
        %2678 = vmatpush.bf16.msra.mxu0 %v2534
        %2679 = vmatpush.bf16.msra.mxu0 %v2526
        %2680 = vmatpush.bf16.msra.mxu0 %v2518
        %2681 = vmatpush.bf16.msra.mxu0 %v2510
        %2682 = vmatpush.bf16.msra.mxu0 %v2502
        %2683 = vmatpush.bf16.msra.mxu0 %v2494
        %2684 = vmatpush.bf16.msra.mxu0 %v2486
        %2685 = vmatpush.bf16.msra.mxu0 %v2478
        %2686 = vmatmul.bf16.gmra.mxu0 %v1231
        %v2687 = vpop.f32.mrf.mxu0
        %v2688 = vadd.f32 %v2251, %v2687
        %v2689 = vpop.f32.mrf.mxu0
        %2690 = vdwg.mxu0
        %2691 = vmatpush.bf16.msra.mxu0 %v2535
        %2692 = vmatpush.bf16.msra.mxu0 %v2527
        %2693 = vmatpush.bf16.msra.mxu0 %v2519
        %2694 = vmatpush.bf16.msra.mxu0 %v2511
        %2695 = vmatpush.bf16.msra.mxu0 %v2503
        %2696 = vmatpush.bf16.msra.mxu0 %v2495
        %2697 = vmatpush.bf16.msra.mxu0 %v2487
        %2698 = vmatpush.bf16.msra.mxu0 %v2479
        %2699 = vmatmul.bf16.gmra.mxu0 %v1231
        %v2700 = vpop.f32.mrf.mxu0
        %v2701 = vadd.f32 %v2277, %v2700
        %v2702 = vpop.f32.mrf.mxu0
        %2703 = vdwg.mxu0
        %v2704 = vld [vmem:[#allocation15] sm:$0xff]
        %v2706 = vperm.slane %v2704, 0
        %v2707 = vperm.slane %v2704, 1
        %v2708 = vperm.slane %v2704, 2
        %v2709 = vperm.slane %v2704, 3
        %v2710 = vperm.slane %v2704, 4
        %v2711 = vperm.slane %v2704, 5
        %v2712 = vperm.slane %v2704, 6
        %v2713 = vperm.slane %v2704, 7
        %v2722 = vadd.f32 %v2610, %v2706
        %v2723 = vadd.f32 %v2623, %v2707
        %v2724 = vadd.f32 %v2636, %v2708
        %v2725 = vadd.f32 %v2649, %v2709
        %v2726 = vadd.f32 %v2662, %v2710
        %v2727 = vadd.f32 %v2675, %v2711
        %v2728 = vadd.f32 %v2688, %v2712
        %v2729 = vadd.f32 %v2701, %v2713
        %v2730 = vxor.u32 %v2722, 2147483648
        %v2731 = vxor.u32 %v2723, 2147483648
        %v2732 = vmul.f32 %v2730, 1.442695
        %v2733 = vpow.pop %v2732
        %v2734 = vmul.f32 %v2731, 1.442695
        %v2735 = vpow.pop %v2734
        %v2736 = vadd.f32 %v2733, 1.0
        %v2737 = vadd.f32 %v2735, 1.0
        %v2738 = vrcp.pop %v2736
        %v2739 = vmul.f32 %v2736, %v2738
        %v2740 = vsub.f32 1.0, %v2739
        %v2741 = vmul.f32 %v2738, %v2740
        %v2742 = vadd.f32 %v2738, %v2741
        %vm2743 = vweird.f32 %v2736
        %vm2744 = vweird.f32 %v2738
        %vm2745 = vmor %vm2743, %vm2744
        %v2746 = vsel %vm2745, %v2738, %v2742
        %v2747 = vand.u32 2147483647, %v2736
        %vm2748 = vcmp.eq.f32.partialorder %v2747, 8.507059e+37
        %v2749 = vand.u32 %v2736, 2147483648
        %v2750 = vor.u32 1.1754944e-38, %v2749
        %v2751 = vsel %vm2748, %v2750, %v2746
        %v2752 = vmul.f32 1.0, %v2751
        %v2753 = vrcp.pop %v2737
        %v2754 = vmul.f32 %v2737, %v2753
        %v2755 = vsub.f32 1.0, %v2754
        %v2756 = vmul.f32 %v2753, %v2755
        %v2757 = vadd.f32 %v2753, %v2756
        %vm2758 = vweird.f32 %v2737
        %vm2759 = vweird.f32 %v2753
        %vm2760 = vmor %vm2758, %vm2759
        %v2761 = vsel %vm2760, %v2753, %v2757
        %v2762 = vand.u32 2147483647, %v2737
        %vm2763 = vcmp.eq.f32.partialorder %v2762, 8.507059e+37
        %v2764 = vand.u32 %v2737, 2147483648
        %v2765 = vor.u32 1.1754944e-38, %v2764
        %v2766 = vsel %vm2763, %v2765, %v2761
        %v2767 = vmul.f32 1.0, %v2766
        %v2768 = vxor.u32 %v2724, 2147483648
        %v2769 = vxor.u32 %v2725, 2147483648
        %v2770 = vmul.f32 %v2768, 1.442695
        %v2771 = vpow.pop %v2770
        %v2772 = vmul.f32 %v2769, 1.442695
        %v2773 = vpow.pop %v2772
        %v2774 = vadd.f32 %v2771, 1.0
        %v2775 = vadd.f32 %v2773, 1.0
        %v2776 = vrcp.pop %v2774
        %v2777 = vmul.f32 %v2774, %v2776
        %v2778 = vsub.f32 1.0, %v2777
        %v2779 = vmul.f32 %v2776, %v2778
        %v2780 = vadd.f32 %v2776, %v2779
        %vm2781 = vweird.f32 %v2774
        %vm2782 = vweird.f32 %v2776
        %vm2783 = vmor %vm2781, %vm2782
        %v2784 = vsel %vm2783, %v2776, %v2780
        %v2785 = vand.u32 2147483647, %v2774
        %vm2786 = vcmp.eq.f32.partialorder %v2785, 8.507059e+37
        %v2787 = vand.u32 %v2774, 2147483648
        %v2788 = vor.u32 1.1754944e-38, %v2787
        %v2789 = vsel %vm2786, %v2788, %v2784
        %v2790 = vmul.f32 1.0, %v2789
        %v2791 = vrcp.pop %v2775
        %v2792 = vmul.f32 %v2775, %v2791
        %v2793 = vsub.f32 1.0, %v2792
        %v2794 = vmul.f32 %v2791, %v2793
        %v2795 = vadd.f32 %v2791, %v2794
        %vm2796 = vweird.f32 %v2775
        %vm2797 = vweird.f32 %v2791
        %vm2798 = vmor %vm2796, %vm2797
        %v2799 = vsel %vm2798, %v2791, %v2795
        %v2800 = vand.u32 2147483647, %v2775
        %vm2801 = vcmp.eq.f32.partialorder %v2800, 8.507059e+37
        %v2802 = vand.u32 %v2775, 2147483648
        %v2803 = vor.u32 1.1754944e-38, %v2802
        %v2804 = vsel %vm2801, %v2803, %v2799
        %v2805 = vmul.f32 1.0, %v2804
        %v2806 = vtanh.pop %v2726
        %v2807 = vtanh.pop %v2727
        %v2808 = vxor.u32 %v2728, 2147483648
        %v2809 = vxor.u32 %v2729, 2147483648
        %v2810 = vmul.f32 %v2808, 1.442695
        %v2811 = vpow.pop %v2810
        %v2812 = vmul.f32 %v2809, 1.442695
        %v2813 = vpow.pop %v2812
        %v2814 = vadd.f32 %v2811, 1.0
        %v2815 = vadd.f32 %v2813, 1.0
        %v2816 = vrcp.pop %v2814
        %v2817 = vmul.f32 %v2814, %v2816
        %v2818 = vsub.f32 1.0, %v2817
        %v2819 = vmul.f32 %v2816, %v2818
        %v2820 = vadd.f32 %v2816, %v2819
        %vm2821 = vweird.f32 %v2814
        %vm2822 = vweird.f32 %v2816
        %vm2823 = vmor %vm2821, %vm2822
        %v2824 = vsel %vm2823, %v2816, %v2820
        %v2825 = vand.u32 2147483647, %v2814
        %vm2826 = vcmp.eq.f32.partialorder %v2825, 8.507059e+37
        %v2827 = vand.u32 %v2814, 2147483648
        %v2828 = vor.u32 1.1754944e-38, %v2827
        %v2829 = vsel %vm2826, %v2828, %v2824
        %v2830 = vmul.f32 1.0, %v2829
        %v2831 = vrcp.pop %v2815
        %v2832 = vmul.f32 %v2815, %v2831
        %v2833 = vsub.f32 1.0, %v2832
        %v2834 = vmul.f32 %v2831, %v2833
        %v2835 = vadd.f32 %v2831, %v2834
        %vm2836 = vweird.f32 %v2815
        %vm2837 = vweird.f32 %v2831
        %vm2838 = vmor %vm2836, %vm2837
        %v2839 = vsel %vm2838, %v2831, %v2835
        %v2840 = vand.u32 2147483647, %v2815
        %vm2841 = vcmp.eq.f32.partialorder %v2840, 8.507059e+37
        %v2842 = vand.u32 %v2815, 2147483648
        %v2843 = vor.u32 1.1754944e-38, %v2842
        %v2844 = vsel %vm2841, %v2843, %v2839
        %v2845 = vmul.f32 1.0, %v2844
        %2847 = vst [vmem:[#allocation1] ss:$4 sm:$0xff] %v576
        %v2848 = vld.sshfl [vmem:[#allocation1] sm:$0xff pattern:$0x73625140]
        %v2849 = vld.sshfl [vmem:[#allocation1 + $0x8] sm:$0xff pattern:$0x73625140]
        %v2852 = vmul.f32 %v2790, %v2848
        %v2853 = vmul.f32 %v2805, %v2849
        %v2854 = vmul.f32 %v2752, %v2806
        %v2855 = vmul.f32 %v2767, %v2807
        %v2856 = vadd.f32 %v2852, %v2854
        %v2857 = vadd.f32 %v2853, %v2855
        %v2858 = vtanh.pop %v2856
        %v2859 = vtanh.pop %v2857
        %v2860 = vmul.f32 %v2830, %v2858
        %v2861 = vmul.f32 %v2845, %v2859
        %v2864 = vrot.slane %v2861, 6
        %vm2865 = vcmask 1041408
        %v2866 = vsel %vm2865, %v2860, %v2864
        %2868 = vst [vmem:[#allocation2] sm:$0xf] %v2866
        %v2871 = vrot.slane %v2857, 6
        %v2872 = vsel %vm2865, %v2856, %v2871
        %2874 = vst [vmem:[#allocation2 + $0x4] sm:$0xf] %v2872
        %2875 = vst [vmem:[%s567] sm:$0xf] %v2866
        %2876 = vst [vmem:[%s567 + $0x4] sm:$0xf] %v2872
        %v2877 = vpack.c.bf16 %v2860, %v2860
        %v2878 = vpack.c.bf16 %v2861, %v2861
        %v2879 = vld [vmem:[#allocation17] sm:$0xf]
        %v2880 = vld [vmem:[#allocation17 + $0x4] sm:$0xf]
        %v2881 = vld [vmem:[#allocation17 + $0x8] sm:$0xf]
        %v2882 = vld [vmem:[#allocation17 + $0xc] sm:$0xf]
        %v2883 = vld [vmem:[#allocation17 + $0x10] sm:$0xf]
        %v2884 = vld [vmem:[#allocation17 + $0x14] sm:$0xf]
        %v2885 = vld [vmem:[#allocation17 + $0x18] sm:$0xf]
        %v2886 = vld [vmem:[#allocation17 + $0x1c] sm:$0xf]
        %v2887 = vld [vmem:[#allocation17 + $0x20] sm:$0xf]
        %v2888 = vld [vmem:[#allocation17 + $0x24] sm:$0xf]
        %v2889 = vld [vmem:[#allocation17 + $0x28] sm:$0xf]
        %v2890 = vld [vmem:[#allocation17 + $0x2c] sm:$0xf]
        %v2891 = vld [vmem:[#allocation17 + $0x30] sm:$0xf]
        %v2892 = vld [vmem:[#allocation17 + $0x34] sm:$0xf]
        %v2893 = vld [vmem:[#allocation17 + $0x38] sm:$0xf]
        %v2894 = vld [vmem:[#allocation17 + $0x3c] sm:$0xf]
        %v2895 = vld [vmem:[#allocation17 + $0x40] sm:$0xf]
        %v2896 = vld [vmem:[#allocation17 + $0x44] sm:$0xf]
        %v2897 = vld [vmem:[#allocation17 + $0x48] sm:$0xf]
        %v2898 = vld [vmem:[#allocation17 + $0x4c] sm:$0xf]
        %v2899 = vld [vmem:[#allocation17 + $0x50] sm:$0xf]
        %v2900 = vld [vmem:[#allocation17 + $0x54] sm:$0xf]
        %v2901 = vld [vmem:[#allocation17 + $0x58] sm:$0xf]
        %v2902 = vld [vmem:[#allocation17 + $0x5c] sm:$0xf]
        %v2903 = vld [vmem:[#allocation17 + $0x60] sm:$0xf]
        %v2904 = vld [vmem:[#allocation17 + $0x64] sm:$0xf]
        %v2905 = vld [vmem:[#allocation17 + $0x68] sm:$0xf]
        %v2906 = vld [vmem:[#allocation17 + $0x6c] sm:$0xf]
        %v2907 = vld [vmem:[#allocation17 + $0x70] sm:$0xf]
        %v2908 = vld [vmem:[#allocation17 + $0x74] sm:$0xf]
        %v2909 = vld [vmem:[#allocation17 + $0x78] sm:$0xf]
        %v2910 = vld [vmem:[#allocation17 + $0x7c] sm:$0xf]
        %v2911 = vld [vmem:[%s10] sm:$0x1]
        %v2913 = vperm.slane %v2911, 0
        %v2947 = vunpack.c.l.b16 %v2879
        %v2948 = vunpack.c.l.b16 %v2880
        %v2949 = vunpack.c.l.b16 %v2881
        %v2950 = vunpack.c.l.b16 %v2882
        %v2951 = vunpack.c.l.b16 %v2883
        %v2952 = vunpack.c.l.b16 %v2884
        %v2953 = vunpack.c.l.b16 %v2885
        %v2954 = vunpack.c.l.b16 %v2886
        %v2955 = vunpack.c.l.b16 %v2887
        %v2956 = vunpack.c.l.b16 %v2888
        %v2957 = vunpack.c.l.b16 %v2889
        %v2958 = vunpack.c.l.b16 %v2890
        %v2959 = vunpack.c.l.b16 %v2891
        %v2960 = vunpack.c.l.b16 %v2892
        %v2961 = vunpack.c.l.b16 %v2893
        %v2962 = vunpack.c.l.b16 %v2894
        %v2963 = vunpack.c.l.b16 %v2895
        %v2964 = vunpack.c.l.b16 %v2896
        %v2965 = vunpack.c.l.b16 %v2897
        %v2966 = vunpack.c.l.b16 %v2898
        %v2967 = vunpack.c.l.b16 %v2899
        %v2968 = vunpack.c.l.b16 %v2900
        %v2969 = vunpack.c.l.b16 %v2901
        %v2970 = vunpack.c.l.b16 %v2902
        %v2971 = vunpack.c.l.b16 %v2903
        %v2972 = vunpack.c.l.b16 %v2904
        %v2973 = vunpack.c.l.b16 %v2905
        %v2974 = vunpack.c.l.b16 %v2906
        %v2975 = vunpack.c.l.b16 %v2907
        %v2976 = vunpack.c.l.b16 %v2908
        %v2977 = vunpack.c.l.b16 %v2909
        %v2978 = vunpack.c.l.b16 %v2910
        %v2979 = vpack.c.b16 %v2948, %v2947
        %v2980 = vpack.c.b16 %v2950, %v2949
        %v2981 = vpack.c.b16 %v2952, %v2951
        %v2982 = vpack.c.b16 %v2954, %v2953
        %v2983 = vpack.c.b16 %v2956, %v2955
        %v2984 = vpack.c.b16 %v2958, %v2957
        %v2985 = vpack.c.b16 %v2960, %v2959
        %v2986 = vpack.c.b16 %v2962, %v2961
        %v2987 = vpack.c.b16 %v2964, %v2963
        %v2988 = vpack.c.b16 %v2966, %v2965
        %v2989 = vpack.c.b16 %v2968, %v2967
        %v2990 = vpack.c.b16 %v2970, %v2969
        %v2991 = vpack.c.b16 %v2972, %v2971
        %v2992 = vpack.c.b16 %v2974, %v2973
        %v2993 = vpack.c.b16 %v2976, %v2975
        %v2994 = vpack.c.b16 %v2978, %v2977
        %3011 = vmatpush.bf16.msra.mxu0 %v2986
        %3012 = vmatpush.bf16.msra.mxu0 %v2985
        %3013 = vmatpush.bf16.msra.mxu0 %v2984
        %3014 = vmatpush.bf16.msra.mxu0 %v2983
        %3015 = vmatpush.bf16.msra.mxu0 %v2982
        %3016 = vmatpush.bf16.msra.mxu0 %v2981
        %3017 = vmatpush.bf16.msra.mxu0 %v2980
        %3018 = vmatpush.bf16.msra.mxu0 %v2979
        %3019 = vmatmul.bf16.gmra.mxu0 %v2877
        %v3020 = vpop.f32.mrf.mxu0
        %v3021 = vadd.f32 %v2913, %v3020
        %v3022 = vpop.f32.mrf.mxu0
        %3023 = vdwg.mxu0
        %3024 = vmatpush.bf16.msra.mxu0 %v2994
        %3025 = vmatpush.bf16.msra.mxu0 %v2993
        %3026 = vmatpush.bf16.msra.mxu0 %v2992
        %3027 = vmatpush.bf16.msra.mxu0 %v2991
        %3028 = vmatpush.bf16.msra.mxu0 %v2990
        %3029 = vmatpush.bf16.msra.mxu0 %v2989
        %3030 = vmatpush.bf16.msra.mxu0 %v2988
        %3031 = vmatpush.bf16.msra.mxu0 %v2987
        %3032 = vmatmul.bf16.gmra.mxu0 %v2878
        %v3033 = vpop.f32.mrf.mxu0
        %v3034 = vadd.f32 %v3021, %v3033
        %v3035 = vpop.f32.mrf.mxu0
        %3036 = vdwg.mxu0
        %v3037 = vlaneseq
        %v3038 = vand.u32 %v3037, 127
        %vm3039 = vcmp.lt.s32.totalorder %v3038, 4
        %v3040 = vsel %vm3039, %v3034, -1e+30
        %v3041 = vsel %vm2865, %v3040, -inf
        %3042 = vmax.xlane.f32.xlu0 %v3041
        %v3043 = vpop.xlane.xlu0 %3042
        %v3044 = vsub.f32 %v3040, %v3043
        %v3045 = vmul.f32 %v3044, 1.442695
        %v3046 = vpow.pop %v3045
        %v3047 = vsel %vm3039, %v3046, 0.0
        %v3048 = vsel %vm2865, %v3047, 0.0
        %3049 = vadd.xlane.f32.xlu0 %v3048
        %v3050 = vpop.xlane.xlu0 %3049
        %v3051 = vrcp.pop %v3050
        %v3052 = vmul.f32 %v3047, %v3051
        %v3053 = vsel %vm3039, %v3052, %v3034
        %3054 = vst [vmem:[%s560] sm:$0x3] %v3053
        %s3055 = sand.u32 %s281, 1
        %s3056 = scalar_lea.sflag [#allocation5], %s3055
        %s3057 = sand.u32 %s281, 1
        %s3058 = smul.addr %s3057, 2
        %s3059 = scalar_lea.vmem [#allocation18], %s3058
        %s3060 = sand.u32 %s307, 1
        %s3061 = scalar_lea.sflag [#allocation20], %s3060
        %s3062 = sand.u32 %s307, 1
        %s3063 = smul.addr %s3062, 8
        %s3064 = scalar_lea.vmem [#allocation19], %s3063
        // Predicated region
        $region105: #{tpu_custom_call.1} parent=63 // pred_check
          %p3065 = pneg %p291
        $region106: #{tpu_custom_call.1} parent=63 // pred_check_branch
          %3067 = sbr.rel (%p3065) target = $region108
        $region107: #{tpu_custom_call.1} parent=63 // pred_region
          %3069 = vsyncadd %s3056, 0
          %s3070 = smul.addr %s37, 2
          %s3071 = scalar_lea.hbm %s11, %s3070
          %s3073 = sshll.u32 %s3059, 4
          %s3074 = int_to_ptr.vmem [resolvable:$true] %s3073
          %s3075 = sshll.u32 %s3071, 4
          %s3076 = int_to_ptr.hbm [resolvable:$true] %s3075
          %3078 = dma.vmem_to_hbm [thread:$0]  %s3074, 32, %s3076, %s3056
        $region108: #{tpu_custom_call.1} parent=63 // pred_fallthru
          _
        // Predicated region
        $region109: #{tpu_custom_call.1} parent=63 // pred_check
          %p3079 = pneg %p317
        $region110: #{tpu_custom_call.1} parent=63 // pred_check_branch
          %3081 = sbr.rel (%p3079) target = $region112
        $region111: #{tpu_custom_call.1} parent=63 // pred_region
          %3083 = vsyncadd %s3061, 0
          %s3084 = smul.addr %s37, 4
          %s3085 = smul.addr %s3084, 2
          %s3086 = scalar_lea.hbm %s12, %s3085
          %s3088 = sshll.u32 %s3064, 4
          %s3089 = int_to_ptr.vmem [resolvable:$true] %s3088
          %s3090 = sshll.u32 %s3086, 4
          %s3091 = int_to_ptr.hbm [resolvable:$true] %s3090
          %3093 = dma.vmem_to_hbm [thread:$0]  %s3089, 128, %s3091, %s3061
        $region112: #{tpu_custom_call.1} parent=63 // pred_fallthru
          _
      $region64: #{tpu_custom_call.1} parent=5 // pred_fallthru
        _
      %p3094 = scmp.le.s32.totalorder 2, %s32
      // Predicated region
      $region113: #{tpu_custom_call.1} parent=5 // pred_check
        %p3095 = pneg %p3094
      $region114: #{tpu_custom_call.1} parent=5 // pred_check_branch
        %3097 = sbr.rel (%p3095) target = $region116
      $region115: #{tpu_custom_call.1} parent=5 // pred_region
        %s3098 = ssub.s32 %s32, 2
        // Predicated region
        $region117: #{tpu_custom_call.1} parent=115 // pred_check
          %p3099 = pneg %p297
        $region118: #{tpu_custom_call.1} parent=115 // pred_check_branch
          %3101 = sbr.rel (%p3099) target = $region120
        $region119: #{tpu_custom_call.1} parent=115 // pred_region
          %s3102 = sand.u32 %s282, 1
          %s3103 = scalar_lea.sflag [#allocation5], %s3102
          %s3104 = sand.u32 %s282, 1
          %s3105 = smul.addr %s3104, 2
          %s3106 = scalar_lea.vmem [#allocation18], %s3105
          %3108 = dma.done %s3103, 32
        $region120: #{tpu_custom_call.1} parent=115 // pred_fallthru
          _
        // Predicated region
        $region121: #{tpu_custom_call.1} parent=115 // pred_check
          %p3109 = pneg %p323
        $region122: #{tpu_custom_call.1} parent=115 // pred_check_branch
          %3111 = sbr.rel (%p3109) target = $region124
        $region123: #{tpu_custom_call.1} parent=115 // pred_region
          %s3112 = sand.u32 %s308, 1
          %s3113 = scalar_lea.sflag [#allocation20], %s3112
          %s3114 = sand.u32 %s308, 1
          %s3115 = smul.addr %s3114, 8
          %s3116 = scalar_lea.vmem [#allocation19], %s3115
          %3118 = dma.done %s3113, 128
        $region124: #{tpu_custom_call.1} parent=115 // pred_fallthru
          _
      $region116: #{tpu_custom_call.1} parent=5 // pred_fallthru
        _
    $region6: #{tpu_custom_call.1} parent=1 // loop_footer
      %s36 = sadd.s32 1, %s32
    $region7: #{tpu_custom_call.1} parent=1 // loop_footer_branch
      %31 = sbr.rel target = $region3
    $region8: #{tpu_custom_call.1} parent=1 // loop_exit
      _
    %3119 = vsyncpa [#allocation4], 1
    %s3120 = scalar_lea.sflag [#allocation4], 1
    %3121 = vsyncpa %s3120, 1
    %3122 = vsyncpa [#allocation7], 1
    %3123 = vsyncpa [#allocation10], 1
    %3124 = vsyncpa [#allocation13], 1
    %3125 = vsyncpa [#allocation16], 1
    %3126 = vsyncpa [#allocation5], 1
    %s3127 = scalar_lea.sflag [#allocation5], 1
    %3128 = vsyncpa %s3127, 1
    %3129 = vsyncpa [#allocation20], 1
    %s3130 = scalar_lea.sflag [#allocation20], 1
    %3131 = vsyncpa %s3130, 1

</llo_original>
